<compile_context>
chip_gen: v7x
topology: tpu7x:2x2x1
jax: 0.10.0
libtpu: 0.0.40
codegen_flags: <defaults>
</compile_context>

<pallas_src>
import jax
import jax.numpy as jnp
from jax.experimental import pallas as pl
from jax.experimental.pallas import tpu as pltpu

# ------------------------- config (small, deterministic) -------------------------
SEQ_LEN = 16      # L  (configs.seq_len)
PRED_LEN = 8      # H  (configs.pred_len)
ENC_IN = 4        # C  (configs.enc_in, number of variates)
D_MODEL = 32      # hidden width of the mixer MLPs
E_LAYERS = 2      # number of mixer blocks
K_LEADERS = 2     # LIFT: leading indicators per target variate
MAX_LAG = 4       # LIFT: maximum considered lead lag
TAU = MAX_LAG + 1

CL = ENC_IN * SEQ_LEN        # 64   flattened (channel, time) width
CD = ENC_IN * D_MODEL        # 128  temporal-mix hidden width (block-diag)
LD = SEQ_LEN * D_MODEL       # 512  channel-mix hidden width (block-diag)
OUT_W = ENC_IN * PRED_LEN    # 32   flattened (channel, horizon) width
WEXP_COLS = ENC_IN * TAU * OUT_W   # 640  precomputed LIFT selection width
SLAB_COLS = LD               # 512  widest packed weight

BATCH_TILE_MAX = 512         # batch rows per grid step (multiple of 32)


# --------------------------- packed weight slab layout ----------------------------
def _round_up(n, m):
    return ((n + m - 1) // m) * m


def _build_slab_layout():
    """Row offsets of every weight inside the packed [rows, SLAB_COLS] bf16 slab.
    Every section starts on a 16-row boundary (bf16 sublane tile) -> aligned loads."""
    offsets = {}
    off = 0

    def add(name, rows, cols):
        nonlocal off
        offsets[name] = (off, rows, cols)
        off += _round_up(rows, 16)

    for l in range(E_LAYERS):
        add(f'wt1_{l}', CL, CD)
        add(f'bt1_{l}', 1, CD)
        add(f'wt2_{l}', CD, CL)
        add(f'bt2_{l}', 1, CL)
        add(f'wc1_{l}', CL, LD)
        add(f'bc1_{l}', 1, LD)
        add(f'wc2_{l}', LD, CL)
        add(f'bc2_{l}', 1, CL)
    add('wp', CL, OUT_W)
    add('bp', 1, OUT_W)
    add('wr', 1, K_LEADERS + 1)
    return offsets, _round_up(off, 16)


_SLAB_OFFSETS, _SLAB_ROWS = _build_slab_layout()


def pack_weights(p):
    """Build block-diagonal mixer weights and pack everything into one
    [_SLAB_ROWS, SLAB_COLS] bf16 slab.  Called ONCE, outside the jitted forward."""
    eye_c = jnp.eye(ENC_IN, dtype=jnp.float32)
    eye_l = jnp.eye(SEQ_LEN, dtype=jnp.float32)
    slab = jnp.zeros((_SLAB_ROWS, SLAB_COLS), jnp.float32)

    def put(s, name, mat):
        off, r, c = _SLAB_OFFSETS[name]
        return s.at[off:off + r, :c].set(mat.astype(jnp.float32))

    for l in range(E_LAYERS):
        # temporal mix: activation cols are (c, l); weights replicated per channel
        slab = put(slab, f'wt1_{l}', jnp.kron(eye_c, p['wt1'][l]))              # [CL, CD]
        slab = put(slab, f'bt1_{l}', jnp.tile(p['bt1'][l], ENC_IN)[None, :])    # [1, CD]
        slab = put(slab, f'wt2_{l}', jnp.kron(eye_c, p['wt2'][l]))              # [CD, CL]
        slab = put(slab, f'bt2_{l}', jnp.tile(p['bt2'][l], ENC_IN)[None, :])    # [1, CL]
        # channel mix: W[(c*L+l), (l'*D+d)] = wc1[c,d] * [l==l']
        wc1_bd = jnp.einsum('cd,le->cled', p['wc1'][l], eye_l).reshape(CL, LD)
        slab = put(slab, f'wc1_{l}', wc1_bd)
        slab = put(slab, f'bc1_{l}', jnp.tile(p['bc1'][l], SEQ_LEN)[None, :])   # [1, LD]
        # W[(l*D+d), (c*L+l')] = wc2[d,c] * [l==l']
        wc2_bd = jnp.einsum('dc,le->ldce', p['wc2'][l], eye_l).reshape(LD, CL)
        slab = put(slab, f'wc2_{l}', wc2_bd)
        slab = put(slab, f'bc2_{l}', jnp.repeat(p['bc2'][l], SEQ_LEN)[None, :])  # [1, CL]
    slab = put(slab, 'wp', jnp.kron(eye_c, p['wp']))                            # [CL, C*H]
    slab = put(slab, 'bp', jnp.tile(p['bp'][0], ENC_IN)[None, :])               # [1, C*H]
    slab = put(slab, 'wr', p['w_refine'])                                       # [1, K+1]
    return slab.astype(jnp.bfloat16)


# ------------------------------- fused Pallas kernel -------------------------------
def fused_lift_tsmixer_kernel(x_ref, w_ref, wexp_ref, out_ref):
    """TSMixer backbone + LIFT refinement for one batch tile, all 2-D layouts.

    x_ref:    [BT, C*L]             channel-major flattened history (f32)
    w_ref:    [ROWS, SLAB_COLS]     packed bf16 block-diagonal weight slab
    wexp_ref: [BT, C*TAU*C*H]       precomputed LIFT selection weights (f32)
    out_ref:  [BT*C*H/128, 128]     lane-dense refined prediction
    """
    BT = x_ref.shape[0]

    def w(name):
        off, r, c = _SLAB_OFFSETS[name]
        return w_ref[off:off + r, :c]

    def mxu(act, name):
        return jnp.dot(act.astype(jnp.bfloat16), w(name),
                       preferred_element_type=jnp.float32)

    x = x_ref[...]                                           # [BT, C*L] f32 history
    a = x                                                    # residual stream

    for l in range(E_LAYERS):                                # statically unrolled
        # --- temporal MLP (block-diag over channels), residual ---
        h = jnp.maximum(mxu(a, f'wt1_{l}') + w(f'bt1_{l}'), 0.0)     # [BT, C*D]
        a = a + mxu(h, f'wt2_{l}') + w(f'bt2_{l}')                   # [BT, C*L]
        # --- channel MLP (block-diag over time steps), residual ---
        h2 = jnp.maximum(mxu(a, f'wc1_{l}') + w(f'bc1_{l}'), 0.0)    # [BT, L*D]
        a = a + mxu(h2, f'wc2_{l}') + w(f'bc2_{l}')                  # [BT, C*L]

    # --- temporal projection L -> H (block-diag over channels) ---
    y = mxu(a, 'wp') + w('bp')                               # [BT, C*H]

    # ---------------- LIFT refinement (fused, no HBM round trip of y) ----------------
    off_wr = _SLAB_OFFSETS['wr'][0]
    wr0 = w_ref[off_wr:off_wr + 1, 0:1].astype(jnp.float32)  # [1, 1] backbone weight
    acc = wr0 * y                                            # [BT, C*H]

    wexp = wexp_ref[...]                                     # [BT, C*TAU*C*H]
    # TODO(synk): for small lags the lead window overlaps the backbone prediction
    # region (full history = concat(x, y)); verify against the reference LIFT.
    for cp in range(ENC_IN):
        y_cp = y[:, cp * PRED_LEN:(cp + 1) * PRED_LEN]       # [BT, H]
        for tau in range(TAU):
            if tau == 0:
                win = y_cp
            else:
                win = jnp.concatenate(
                    [x[:, (cp + 1) * SEQ_LEN - tau:(cp + 1) * SEQ_LEN],
                     y_cp[:, :PRED_LEN - tau]], axis=1)      # [BT, H]
            win4 = jnp.concatenate([win] * ENC_IN, axis=1)   # [BT, C*H] (tiled over c)
            j = cp * TAU + tau
            acc = acc + wexp[:, j * OUT_W:(j + 1) * OUT_W] * win4

    # lane-dense store: fold 4 batch rows into one 128-lane row.
    acc3 = acc.reshape(BT // 4, 4, OUT_W)
    out_ref[...] = jnp.concatenate(
        [acc3[:, 0, :], acc3[:, 1, :], acc3[:, 2, :], acc3[:, 3, :]], axis=1)


# ------------------------------------ wrappers --------------------------------------
def _choose_tiling(b):
    """Pick (batch_tile, padded_batch).  Tiles are multiples of 8 (32 when the
    grid has >1 tile, keeping output blocks sublane-aligned); when the batch is
    large enough we aim for >=2 tiles so the parallel grid axis can use both
    v7x TensorCores."""
    b8 = _round_up(b, 8)
    if b8 <= 32:
        return b8, b8
    bt = min(_round_up((b8 + 1) // 2, 32), BATCH_TILE_MAX)
    return bt, _round_up(b8, bt)


def fused_forward(x_flat, slab, w_exp, bt, num_tiles):
    b_pad = x_flat.shape[0]
    out_rows_tile = bt * OUT_W // 128
    return pl.pallas_call(
        fused_lift_tsmixer_kernel,
        out_shape=jax.ShapeDtypeStruct((b_pad * OUT_W // 128, 128), jnp.float32),
        grid=(num_tiles,),
        in_specs=[
            pl.BlockSpec((bt, CL), lambda b: (b, 0)),
            pl.BlockSpec((_SLAB_ROWS, SLAB_COLS), lambda b: (0, 0)),   # grid-invariant
            pl.BlockSpec((bt, WEXP_COLS), lambda b: (b, 0)),
        ],
        out_specs=pl.BlockSpec((out_rows_tile, 128), lambda b: (b, 0)),
        compiler_params=pltpu.CompilerParams(
            dimension_semantics=("parallel",)),
    )(x_flat, slab, w_exp)


def estimate_leads(x):
    """LIFT lead estimation (plain JAX glue): one batched [C,T]@[T,C*TAU] matmul
    for the lagged cross-correlations, then data-dependent top-K / lag pick."""
    B, L, C = x.shape
    xm = x - jnp.mean(x, axis=1, keepdims=True)
    xs = xm / (jnp.sqrt(jnp.mean(xm * xm, axis=1, keepdims=True)) + 1e-6)
    # TODO(synk): normalization uses the full L window while correlations use
    # T = L - MAX_LAG samples; verify against the reference LIFT implementation.
    T = L - MAX_LAG
    base = xs[:, :T, :]                                          # [B, T, C]
    shifted = jnp.concatenate(
        [xs[:, tau:tau + T, :] for tau in range(TAU)], axis=2)   # [B, T, C*TAU]
    corr = jnp.einsum('btj,btm->bjm', base, shifted,
                      preferred_element_type=jnp.float32) / T    # [B, C, C*TAU]
    corr = corr.reshape(B, C, TAU, C).transpose(0, 1, 3, 2)      # [B, j, i, tau]
    eye = jnp.eye(C, dtype=bool)
    corr = jnp.where(eye[None, :, :, None], -1e9, corr)          # exclude self-leads
    best_tau = jnp.argmax(corr, axis=-1)                         # [B, C, C]
    best_corr = jnp.max(corr, axis=-1)                           # [B, C, C]
    # TODO(synk): data-dependent top-K selection stays in plain JAX.
    top_corr, top_idx = jax.lax.top_k(best_corr, K_LEADERS)      # [B, C, K]
    top_lag = jnp.take_along_axis(best_tau, top_idx, axis=-1)    # [B, C, K]
    return top_idx, top_lag, top_corr


def build_w_exp(x, w_refine):
    """Fold softmax over leaders, leader mixing weights and the channel/lag
    one-hots into one selection tensor:
        W_exp[b, (cp*TAU+tau)*C*H + c*H + h] = sum_k w_refine[1+k] * alpha[b,k,c]
                                               * [idx[b,k,c]==cp] * [lag[b,k,c]==tau]."""
    B = x.shape[0]
    top_idx, top_lag, top_corr = estimate_leads(x)               # [B, C, K]
    alpha = jax.nn.softmax(
        jnp.transpose(top_corr, (0, 2, 1)).astype(jnp.float32), axis=1)        # [B, K, C]
    chan_oh = jax.nn.one_hot(jnp.transpose(top_idx, (0, 2, 1)),
                             ENC_IN, dtype=jnp.float32)                          # [B,K,C,C]
    lag_oh = jax.nn.one_hot(jnp.transpose(top_lag, (0, 2, 1)),
                            TAU, dtype=jnp.float32)                              # [B,K,C,TAU]
    lead_w = w_refine[0, 1:].astype(jnp.float32)                 # [K]
    w_sel = jnp.einsum('k,bkc,bkcq,bkct->bcqt',
                       lead_w, alpha, chan_oh, lag_oh)           # [B, C, C, TAU]
    w_exp = jnp.broadcast_to(
        jnp.transpose(w_sel, (0, 2, 3, 1))[..., None],           # [B, cp, tau, c, 1]
        (B, ENC_IN, TAU, ENC_IN, PRED_LEN))
    return w_exp.reshape(B, WEXP_COLS)                           # [B, 640]


def lift_tsmixer_forward(x, slab, w_refine):
    """x: [B, L, C]; slab: packed bf16 weights; returns [B, H, C]."""
    B = x.shape[0]
    # --- LIFT lead estimation + selection folding (plain-JAX glue, depends on x) ---
    w_exp = build_w_exp(x, w_refine)                             # [B, 640] f32
    # --- channel-major flattened history for the kernel ---
    x_flat = jnp.transpose(x, (0, 2, 1)).reshape(B, CL).astype(jnp.float32)
    bt, b_pad = _choose_tiling(B)
    if b_pad != B:
        pad = b_pad - B
        x_flat = jnp.pad(x_flat, ((0, pad), (0, 0)))
        w_exp = jnp.pad(w_exp, ((0, pad), (0, 0)))
    out2d = fused_forward(x_flat, slab, w_exp, bt, b_pad // bt)  # [b_pad*C*H/128, 128]
    out = out2d.reshape(b_pad, ENC_IN, PRED_LEN)[:B]             # [B, C, H]
    return jnp.transpose(out, (0, 2, 1))                         # [B, H, C]


# ------------------------------- parameter init -----------------------------------
def init_params(key):
    ks = jax.random.split(key, 8)

    def lin_w(k, fan_in, shape):
        bound = 1.0 / jnp.sqrt(fan_in)
        return jax.random.uniform(k, shape, jnp.float32, -bound, bound)

    p = {
        'wt1': lin_w(ks[0], SEQ_LEN, (E_LAYERS, SEQ_LEN, D_MODEL)),
        'bt1': jnp.zeros((E_LAYERS, D_MODEL), jnp.float32),
        'wt2': lin_w(ks[1], D_MODEL, (E_LAYERS, D_MODEL, SEQ_LEN)),
        'bt2': jnp.zeros((E_LAYERS, SEQ_LEN), jnp.float32),
        'wc1': lin_w(ks[2], ENC_IN, (E_LAYERS, ENC_IN, D_MODEL)),
        'bc1': jnp.zeros((E_LAYERS, D_MODEL), jnp.float32),
        'wc2': lin_w(ks[3], D_MODEL, (E_LAYERS, D_MODEL, ENC_IN)),
        'bc2': jnp.zeros((E_LAYERS, ENC_IN), jnp.float32),
        'wp': lin_w(ks[4], SEQ_LEN, (SEQ_LEN, PRED_LEN)),
        'bp': jnp.zeros((1, PRED_LEN), jnp.float32),
        # LIFT refinement mixing weights: [w_backbone, w_leader_1..K]
        'w_refine': jnp.concatenate(
            [jnp.ones((1, 1), jnp.float32),
             jnp.full((1, K_LEADERS), 0.1, jnp.float32)], axis=1),
    }
    return p


# ------------------------------------ main -----------------------------------------
if __name__ == "__main__":
    key = jax.random.PRNGKey(0)
    x = jax.random.normal(key, (2, SEQ_LEN, ENC_IN), jnp.float32)   # [B, L, C]
    params = init_params(jax.random.PRNGKey(42))

    # pack the weight slab ONCE, outside the jitted forward path
    slab = pack_weights(params)
    w_refine = params['w_refine']

    fwd = jax.jit(lift_tsmixer_forward)
    out = fwd(x, slab, w_refine)                                    # [B, H, C]
    jax.block_until_ready(out)
    assert out.shape == (2, PRED_LEN, ENC_IN)
    assert bool(jnp.all(jnp.isfinite(out)))
    print("KERNEL_OK")
</pallas_src>

<mosaic_0001>
module attributes {stable_mosaic.version = 11 : i64} {
  func.func @fused_lift_tsmixer_kernel(%arg0: i32, %arg1: memref<8x64xf32, #tpu.memory_space<vmem>>, %arg2: memref<1760x512xbf16, #tpu.memory_space<vmem>>, %arg3: memref<8x640xf32, #tpu.memory_space<vmem>>, %arg4: memref<2x128xf32, #tpu.memory_space<vmem>>) attributes {dimension_semantics = [#tpu.dimension_semantics<parallel>], iteration_bounds = array<i64: 1>, scalar_prefetch = 0 : i64, scratch_operands = 0 : i64, tpu.core_type = #tpu.core_type<tc>, window_params = [{transform_indices = @transform_0, window_bounds = array<i64: 8, 64>}, {pipeline_mode = #tpu.pipeline_mode<synchronous>, transform_indices = @transform_1, window_bounds = array<i64: 1760, 512>}, {transform_indices = @transform_2, window_bounds = array<i64: 8, 640>}, {transform_indices = @transform_3, window_bounds = array<i64: 2, 128>}]} {
    %c0 = arith.constant 0 : index
    %c0_0 = arith.constant 0 : index
    %0 = vector.load %arg1[%c0, %c0_0] : memref<8x64xf32, #tpu.memory_space<vmem>>, vector<8x64xf32>
    %1 = arith.truncf %0 : vector<8x64xf32> to vector<8x64xbf16>
    %c0_1 = arith.constant 0 : index
    %c0_2 = arith.constant 0 : index
    %2 = vector.load %arg2[%c0_1, %c0_2] : memref<1760x512xbf16, #tpu.memory_space<vmem>>, vector<64x128xbf16>
    %cst = arith.constant dense<0.000000e+00> : vector<8x128xf32>
    %3 = tpu.matmul %1, %2, %cst {dimension_numbers = #tpu.dot_dimension_numbers<[1], [0], [0], [1], [0, 0, 1, 1], [], []>} : vector<8x64xbf16>, vector<64x128xbf16>, vector<8x128xf32> -> vector<8x128xf32>
    %c64 = arith.constant 64 : index
    %c0_3 = arith.constant 0 : index
    %4 = vector.load %arg2[%c64, %c0_3] : memref<1760x512xbf16, #tpu.memory_space<vmem>>, vector<1x128xbf16>
    %5 = arith.extf %4 : vector<1x128xbf16> to vector<1x128xf32>
    %6 = vector.broadcast %5 : vector<1x128xf32> to vector<8x128xf32>
    %7 = arith.addf %3, %6 : vector<8x128xf32>
    %cst_4 = arith.constant 0.000000e+00 : f32
    %8 = vector.broadcast %cst_4 : f32 to vector<8x128xf32>
    %9 = arith.maximumf %7, %8 : vector<8x128xf32>
    %10 = arith.truncf %9 : vector<8x128xf32> to vector<8x128xbf16>
    %c80 = arith.constant 80 : index
    %c0_5 = arith.constant 0 : index
    %11 = vector.load %arg2[%c80, %c0_5] : memref<1760x512xbf16, #tpu.memory_space<vmem>>, vector<128x64xbf16>
    %cst_6 = arith.constant dense<0.000000e+00> : vector<8x64xf32>
    %12 = tpu.matmul %10, %11, %cst_6 {dimension_numbers = #tpu.dot_dimension_numbers<[1], [0], [0], [1], [0, 0, 1, 1], [], []>} : vector<8x128xbf16>, vector<128x64xbf16>, vector<8x64xf32> -> vector<8x64xf32>
    %13 = arith.addf %0, %12 : vector<8x64xf32>
    %c208 = arith.constant 208 : index
    %c0_7 = arith.constant 0 : index
    %14 = vector.load %arg2[%c208, %c0_7] : memref<1760x512xbf16, #tpu.memory_space<vmem>>, vector<1x64xbf16>
    %15 = arith.extf %14 : vector<1x64xbf16> to vector<1x64xf32>
    %16 = vector.broadcast %15 : vector<1x64xf32> to vector<8x64xf32>
    %17 = arith.addf %13, %16 : vector<8x64xf32>
    %18 = arith.truncf %17 : vector<8x64xf32> to vector<8x64xbf16>
    %c224 = arith.constant 224 : index
    %c0_8 = arith.constant 0 : index
    %19 = vector.load %arg2[%c224, %c0_8] : memref<1760x512xbf16, #tpu.memory_space<vmem>>, vector<64x512xbf16>
    %cst_9 = arith.constant dense<0.000000e+00> : vector<8x512xf32>
    %20 = tpu.matmul %18, %19, %cst_9 {dimension_numbers = #tpu.dot_dimension_numbers<[1], [0], [0], [1], [0, 0, 1, 1], [], []>} : vector<8x64xbf16>, vector<64x512xbf16>, vector<8x512xf32> -> vector<8x512xf32>
    %c288 = arith.constant 288 : index
    %c0_10 = arith.constant 0 : index
    %21 = vector.load %arg2[%c288, %c0_10] : memref<1760x512xbf16, #tpu.memory_space<vmem>>, vector<1x512xbf16>
    %22 = arith.extf %21 : vector<1x512xbf16> to vector<1x512xf32>
    %23 = vector.broadcast %22 : vector<1x512xf32> to vector<8x512xf32>
    %24 = arith.addf %20, %23 : vector<8x512xf32>
    %cst_11 = arith.constant 0.000000e+00 : f32
    %25 = vector.broadcast %cst_11 : f32 to vector<8x512xf32>
    %26 = arith.maximumf %24, %25 : vector<8x512xf32>
    %27 = arith.truncf %26 : vector<8x512xf32> to vector<8x512xbf16>
    %c304 = arith.constant 304 : index
    %c0_12 = arith.constant 0 : index
    %28 = vector.load %arg2[%c304, %c0_12] : memref<1760x512xbf16, #tpu.memory_space<vmem>>, vector<512x64xbf16>
    %cst_13 = arith.constant dense<0.000000e+00> : vector<8x64xf32>
    %29 = tpu.matmul %27, %28, %cst_13 {dimension_numbers = #tpu.dot_dimension_numbers<[1], [0], [0], [1], [0, 0, 1, 1], [], []>} : vector<8x512xbf16>, vector<512x64xbf16>, vector<8x64xf32> -> vector<8x64xf32>
    %30 = arith.addf %17, %29 : vector<8x64xf32>
    %c816 = arith.constant 816 : index
    %c0_14 = arith.constant 0 : index
    %31 = vector.load %arg2[%c816, %c0_14] : memref<1760x512xbf16, #tpu.memory_space<vmem>>, vector<1x64xbf16>
    %32 = arith.extf %31 : vector<1x64xbf16> to vector<1x64xf32>
    %33 = vector.broadcast %32 : vector<1x64xf32> to vector<8x64xf32>
    %34 = arith.addf %30, %33 : vector<8x64xf32>
    %35 = arith.truncf %34 : vector<8x64xf32> to vector<8x64xbf16>
    %c832 = arith.constant 832 : index
    %c0_15 = arith.constant 0 : index
    %36 = vector.load %arg2[%c832, %c0_15] : memref<1760x512xbf16, #tpu.memory_space<vmem>>, vector<64x128xbf16>
    %cst_16 = arith.constant dense<0.000000e+00> : vector<8x128xf32>
    %37 = tpu.matmul %35, %36, %cst_16 {dimension_numbers = #tpu.dot_dimension_numbers<[1], [0], [0], [1], [0, 0, 1, 1], [], []>} : vector<8x64xbf16>, vector<64x128xbf16>, vector<8x128xf32> -> vector<8x128xf32>
    %c896 = arith.constant 896 : index
    %c0_17 = arith.constant 0 : index
    %38 = vector.load %arg2[%c896, %c0_17] : memref<1760x512xbf16, #tpu.memory_space<vmem>>, vector<1x128xbf16>
    %39 = arith.extf %38 : vector<1x128xbf16> to vector<1x128xf32>
    %40 = vector.broadcast %39 : vector<1x128xf32> to vector<8x128xf32>
    %41 = arith.addf %37, %40 : vector<8x128xf32>
    %cst_18 = arith.constant 0.000000e+00 : f32
    %42 = vector.broadcast %cst_18 : f32 to vector<8x128xf32>
    %43 = arith.maximumf %41, %42 : vector<8x128xf32>
    %44 = arith.truncf %43 : vector<8x128xf32> to vector<8x128xbf16>
    %c912 = arith.constant 912 : index
    %c0_19 = arith.constant 0 : index
    %45 = vector.load %arg2[%c912, %c0_19] : memref<1760x512xbf16, #tpu.memory_space<vmem>>, vector<128x64xbf16>
    %cst_20 = arith.constant dense<0.000000e+00> : vector<8x64xf32>
    %46 = tpu.matmul %44, %45, %cst_20 {dimension_numbers = #tpu.dot_dimension_numbers<[1], [0], [0], [1], [0, 0, 1, 1], [], []>} : vector<8x128xbf16>, vector<128x64xbf16>, vector<8x64xf32> -> vector<8x64xf32>
    %47 = arith.addf %34, %46 : vector<8x64xf32>
    %c1040 = arith.constant 1040 : index
    %c0_21 = arith.constant 0 : index
    %48 = vector.load %arg2[%c1040, %c0_21] : memref<1760x512xbf16, #tpu.memory_space<vmem>>, vector<1x64xbf16>
    %49 = arith.extf %48 : vector<1x64xbf16> to vector<1x64xf32>
    %50 = vector.broadcast %49 : vector<1x64xf32> to vector<8x64xf32>
    %51 = arith.addf %47, %50 : vector<8x64xf32>
    %52 = arith.truncf %51 : vector<8x64xf32> to vector<8x64xbf16>
    %c1056 = arith.constant 1056 : index
    %c0_22 = arith.constant 0 : index
    %53 = vector.load %arg2[%c1056, %c0_22] : memref<1760x512xbf16, #tpu.memory_space<vmem>>, vector<64x512xbf16>
    %cst_23 = arith.constant dense<0.000000e+00> : vector<8x512xf32>
    %54 = tpu.matmul %52, %53, %cst_23 {dimension_numbers = #tpu.dot_dimension_numbers<[1], [0], [0], [1], [0, 0, 1, 1], [], []>} : vector<8x64xbf16>, vector<64x512xbf16>, vector<8x512xf32> -> vector<8x512xf32>
    %c1120 = arith.constant 1120 : index
    %c0_24 = arith.constant 0 : index
    %55 = vector.load %arg2[%c1120, %c0_24] : memref<1760x512xbf16, #tpu.memory_space<vmem>>, vector<1x512xbf16>
    %56 = arith.extf %55 : vector<1x512xbf16> to vector<1x512xf32>
    %57 = vector.broadcast %56 : vector<1x512xf32> to vector<8x512xf32>
    %58 = arith.addf %54, %57 : vector<8x512xf32>
    %cst_25 = arith.constant 0.000000e+00 : f32
    %59 = vector.broadcast %cst_25 : f32 to vector<8x512xf32>
    %60 = arith.maximumf %58, %59 : vector<8x512xf32>
    %61 = arith.truncf %60 : vector<8x512xf32> to vector<8x512xbf16>
    %c1136 = arith.constant 1136 : index
    %c0_26 = arith.constant 0 : index
    %62 = vector.load %arg2[%c1136, %c0_26] : memref<1760x512xbf16, #tpu.memory_space<vmem>>, vector<512x64xbf16>
    %cst_27 = arith.constant dense<0.000000e+00> : vector<8x64xf32>
    %63 = tpu.matmul %61, %62, %cst_27 {dimension_numbers = #tpu.dot_dimension_numbers<[1], [0], [0], [1], [0, 0, 1, 1], [], []>} : vector<8x512xbf16>, vector<512x64xbf16>, vector<8x64xf32> -> vector<8x64xf32>
    %64 = arith.addf %51, %63 : vector<8x64xf32>
    %c1648 = arith.constant 1648 : index
    %c0_28 = arith.constant 0 : index
    %65 = vector.load %arg2[%c1648, %c0_28] : memref<1760x512xbf16, #tpu.memory_space<vmem>>, vector<1x64xbf16>
    %66 = arith.extf %65 : vector<1x64xbf16> to vector<1x64xf32>
    %67 = vector.broadcast %66 : vector<1x64xf32> to vector<8x64xf32>
    %68 = arith.addf %64, %67 : vector<8x64xf32>
    %69 = arith.truncf %68 : vector<8x64xf32> to vector<8x64xbf16>
    %c1664 = arith.constant 1664 : index
    %c0_29 = arith.constant 0 : index
    %70 = vector.load %arg2[%c1664, %c0_29] : memref<1760x512xbf16, #tpu.memory_space<vmem>>, vector<64x32xbf16>
    %cst_30 = arith.constant dense<0.000000e+00> : vector<8x32xf32>
    %71 = tpu.matmul %69, %70, %cst_30 {dimension_numbers = #tpu.dot_dimension_numbers<[1], [0], [0], [1], [0, 0, 1, 1], [], []>} : vector<8x64xbf16>, vector<64x32xbf16>, vector<8x32xf32> -> vector<8x32xf32>
    %c1728 = arith.constant 1728 : index
    %c0_31 = arith.constant 0 : index
    %72 = vector.load %arg2[%c1728, %c0_31] : memref<1760x512xbf16, #tpu.memory_space<vmem>>, vector<1x32xbf16>
    %73 = arith.extf %72 : vector<1x32xbf16> to vector<1x32xf32>
    %74 = vector.broadcast %73 : vector<1x32xf32> to vector<8x32xf32>
    %75 = arith.addf %71, %74 : vector<8x32xf32>
    %c1744 = arith.constant 1744 : index
    %c0_32 = arith.constant 0 : index
    %76 = vector.load %arg2[%c1744, %c0_32] : memref<1760x512xbf16, #tpu.memory_space<vmem>>, vector<1x1xbf16>
    %77 = arith.extf %76 : vector<1x1xbf16> to vector<1x1xf32>
    %78 = vector.broadcast %77 : vector<1x1xf32> to vector<8x32xf32>
    %79 = arith.mulf %78, %75 : vector<8x32xf32>
    %c0_33 = arith.constant 0 : index
    %c0_34 = arith.constant 0 : index
    %80 = vector.load %arg3[%c0_33, %c0_34] : memref<8x640xf32, #tpu.memory_space<vmem>>, vector<8x640xf32>
    %81 = vector.extract_strided_slice %75 {offsets = [0, 0], sizes = [8, 8], strides = [1, 1]} : vector<8x32xf32> to vector<8x8xf32>
    %82 = tpu.concatenate %81, %81, %81, %81 in 1 : vector<8x8xf32>, vector<8x8xf32>, vector<8x8xf32>, vector<8x8xf32> -> vector<8x32xf32>
    %83 = vector.extract_strided_slice %80 {offsets = [0, 0], sizes = [8, 32], strides = [1, 1]} : vector<8x640xf32> to vector<8x32xf32>
    %84 = arith.mulf %83, %82 : vector<8x32xf32>
    %85 = arith.addf %79, %84 : vector<8x32xf32>
    %86 = vector.extract_strided_slice %0 {offsets = [0, 15], sizes = [8, 1], strides = [1, 1]} : vector<8x64xf32> to vector<8x1xf32>
    %87 = vector.extract_strided_slice %81 {offsets = [0, 0], sizes = [8, 7], strides = [1, 1]} : vector<8x8xf32> to vector<8x7xf32>
    %88 = tpu.concatenate %86, %87 in 1 : vector<8x1xf32>, vector<8x7xf32> -> vector<8x8xf32>
    %89 = tpu.concatenate %88, %88, %88, %88 in 1 : vector<8x8xf32>, vector<8x8xf32>, vector<8x8xf32>, vector<8x8xf32> -> vector<8x32xf32>
    %90 = vector.extract_strided_slice %80 {offsets = [0, 32], sizes = [8, 32], strides = [1, 1]} : vector<8x640xf32> to vector<8x32xf32>
    %91 = arith.mulf %90, %89 : vector<8x32xf32>
    %92 = arith.addf %85, %91 : vector<8x32xf32>
    %93 = vector.extract_strided_slice %0 {offsets = [0, 14], sizes = [8, 2], strides = [1, 1]} : vector<8x64xf32> to vector<8x2xf32>
    %94 = vector.extract_strided_slice %81 {offsets = [0, 0], sizes = [8, 6], strides = [1, 1]} : vector<8x8xf32> to vector<8x6xf32>
    %95 = tpu.concatenate %93, %94 in 1 : vector<8x2xf32>, vector<8x6xf32> -> vector<8x8xf32>
    %96 = tpu.concatenate %95, %95, %95, %95 in 1 : vector<8x8xf32>, vector<8x8xf32>, vector<8x8xf32>, vector<8x8xf32> -> vector<8x32xf32>
    %97 = vector.extract_strided_slice %80 {offsets = [0, 64], sizes = [8, 32], strides = [1, 1]} : vector<8x640xf32> to vector<8x32xf32>
    %98 = arith.mulf %97, %96 : vector<8x32xf32>
    %99 = arith.addf %92, %98 : vector<8x32xf32>
    %100 = vector.extract_strided_slice %0 {offsets = [0, 13], sizes = [8, 3], strides = [1, 1]} : vector<8x64xf32> to vector<8x3xf32>
    %101 = vector.extract_strided_slice %81 {offsets = [0, 0], sizes = [8, 5], strides = [1, 1]} : vector<8x8xf32> to vector<8x5xf32>
    %102 = tpu.concatenate %100, %101 in 1 : vector<8x3xf32>, vector<8x5xf32> -> vector<8x8xf32>
    %103 = tpu.concatenate %102, %102, %102, %102 in 1 : vector<8x8xf32>, vector<8x8xf32>, vector<8x8xf32>, vector<8x8xf32> -> vector<8x32xf32>
    %104 = vector.extract_strided_slice %80 {offsets = [0, 96], sizes = [8, 32], strides = [1, 1]} : vector<8x640xf32> to vector<8x32xf32>
    %105 = arith.mulf %104, %103 : vector<8x32xf32>
    %106 = arith.addf %99, %105 : vector<8x32xf32>
    %107 = vector.extract_strided_slice %0 {offsets = [0, 12], sizes = [8, 4], strides = [1, 1]} : vector<8x64xf32> to vector<8x4xf32>
    %108 = vector.extract_strided_slice %81 {offsets = [0, 0], sizes = [8, 4], strides = [1, 1]} : vector<8x8xf32> to vector<8x4xf32>
    %109 = tpu.concatenate %107, %108 in 1 : vector<8x4xf32>, vector<8x4xf32> -> vector<8x8xf32>
    %110 = tpu.concatenate %109, %109, %109, %109 in 1 : vector<8x8xf32>, vector<8x8xf32>, vector<8x8xf32>, vector<8x8xf32> -> vector<8x32xf32>
    %111 = vector.extract_strided_slice %80 {offsets = [0, 128], sizes = [8, 32], strides = [1, 1]} : vector<8x640xf32> to vector<8x32xf32>
    %112 = arith.mulf %111, %110 : vector<8x32xf32>
    %113 = arith.addf %106, %112 : vector<8x32xf32>
    %114 = vector.extract_strided_slice %75 {offsets = [0, 8], sizes = [8, 8], strides = [1, 1]} : vector<8x32xf32> to vector<8x8xf32>
    %115 = tpu.concatenate %114, %114, %114, %114 in 1 : vector<8x8xf32>, vector<8x8xf32>, vector<8x8xf32>, vector<8x8xf32> -> vector<8x32xf32>
    %116 = vector.extract_strided_slice %80 {offsets = [0, 160], sizes = [8, 32], strides = [1, 1]} : vector<8x640xf32> to vector<8x32xf32>
    %117 = arith.mulf %116, %115 : vector<8x32xf32>
    %118 = arith.addf %113, %117 : vector<8x32xf32>
    %119 = vector.extract_strided_slice %0 {offsets = [0, 31], sizes = [8, 1], strides = [1, 1]} : vector<8x64xf32> to vector<8x1xf32>
    %120 = vector.extract_strided_slice %114 {offsets = [0, 0], sizes = [8, 7], strides = [1, 1]} : vector<8x8xf32> to vector<8x7xf32>
    %121 = tpu.concatenate %119, %120 in 1 : vector<8x1xf32>, vector<8x7xf32> -> vector<8x8xf32>
    %122 = tpu.concatenate %121, %121, %121, %121 in 1 : vector<8x8xf32>, vector<8x8xf32>, vector<8x8xf32>, vector<8x8xf32> -> vector<8x32xf32>
    %123 = vector.extract_strided_slice %80 {offsets = [0, 192], sizes = [8, 32], strides = [1, 1]} : vector<8x640xf32> to vector<8x32xf32>
    %124 = arith.mulf %123, %122 : vector<8x32xf32>
    %125 = arith.addf %118, %124 : vector<8x32xf32>
    %126 = vector.extract_strided_slice %0 {offsets = [0, 30], sizes = [8, 2], strides = [1, 1]} : vector<8x64xf32> to vector<8x2xf32>
    %127 = vector.extract_strided_slice %114 {offsets = [0, 0], sizes = [8, 6], strides = [1, 1]} : vector<8x8xf32> to vector<8x6xf32>
    %128 = tpu.concatenate %126, %127 in 1 : vector<8x2xf32>, vector<8x6xf32> -> vector<8x8xf32>
    %129 = tpu.concatenate %128, %128, %128, %128 in 1 : vector<8x8xf32>, vector<8x8xf32>, vector<8x8xf32>, vector<8x8xf32> -> vector<8x32xf32>
    %130 = vector.extract_strided_slice %80 {offsets = [0, 224], sizes = [8, 32], strides = [1, 1]} : vector<8x640xf32> to vector<8x32xf32>
    %131 = arith.mulf %130, %129 : vector<8x32xf32>
    %132 = arith.addf %125, %131 : vector<8x32xf32>
    %133 = vector.extract_strided_slice %0 {offsets = [0, 29], sizes = [8, 3], strides = [1, 1]} : vector<8x64xf32> to vector<8x3xf32>
    %134 = vector.extract_strided_slice %114 {offsets = [0, 0], sizes = [8, 5], strides = [1, 1]} : vector<8x8xf32> to vector<8x5xf32>
    %135 = tpu.concatenate %133, %134 in 1 : vector<8x3xf32>, vector<8x5xf32> -> vector<8x8xf32>
    %136 = tpu.concatenate %135, %135, %135, %135 in 1 : vector<8x8xf32>, vector<8x8xf32>, vector<8x8xf32>, vector<8x8xf32> -> vector<8x32xf32>
    %137 = vector.extract_strided_slice %80 {offsets = [0, 256], sizes = [8, 32], strides = [1, 1]} : vector<8x640xf32> to vector<8x32xf32>
    %138 = arith.mulf %137, %136 : vector<8x32xf32>
    %139 = arith.addf %132, %138 : vector<8x32xf32>
    %140 = vector.extract_strided_slice %0 {offsets = [0, 28], sizes = [8, 4], strides = [1, 1]} : vector<8x64xf32> to vector<8x4xf32>
    %141 = vector.extract_strided_slice %114 {offsets = [0, 0], sizes = [8, 4], strides = [1, 1]} : vector<8x8xf32> to vector<8x4xf32>
    %142 = tpu.concatenate %140, %141 in 1 : vector<8x4xf32>, vector<8x4xf32> -> vector<8x8xf32>
    %143 = tpu.concatenate %142, %142, %142, %142 in 1 : vector<8x8xf32>, vector<8x8xf32>, vector<8x8xf32>, vector<8x8xf32> -> vector<8x32xf32>
    %144 = vector.extract_strided_slice %80 {offsets = [0, 288], sizes = [8, 32], strides = [1, 1]} : vector<8x640xf32> to vector<8x32xf32>
    %145 = arith.mulf %144, %143 : vector<8x32xf32>
    %146 = arith.addf %139, %145 : vector<8x32xf32>
    %147 = vector.extract_strided_slice %75 {offsets = [0, 16], sizes = [8, 8], strides = [1, 1]} : vector<8x32xf32> to vector<8x8xf32>
    %148 = tpu.concatenate %147, %147, %147, %147 in 1 : vector<8x8xf32>, vector<8x8xf32>, vector<8x8xf32>, vector<8x8xf32> -> vector<8x32xf32>
    %149 = vector.extract_strided_slice %80 {offsets = [0, 320], sizes = [8, 32], strides = [1, 1]} : vector<8x640xf32> to vector<8x32xf32>
    %150 = arith.mulf %149, %148 : vector<8x32xf32>
    %151 = arith.addf %146, %150 : vector<8x32xf32>
    %152 = vector.extract_strided_slice %0 {offsets = [0, 47], sizes = [8, 1], strides = [1, 1]} : vector<8x64xf32> to vector<8x1xf32>
    %153 = vector.extract_strided_slice %147 {offsets = [0, 0], sizes = [8, 7], strides = [1, 1]} : vector<8x8xf32> to vector<8x7xf32>
    %154 = tpu.concatenate %152, %153 in 1 : vector<8x1xf32>, vector<8x7xf32> -> vector<8x8xf32>
    %155 = tpu.concatenate %154, %154, %154, %154 in 1 : vector<8x8xf32>, vector<8x8xf32>, vector<8x8xf32>, vector<8x8xf32> -> vector<8x32xf32>
    %156 = vector.extract_strided_slice %80 {offsets = [0, 352], sizes = [8, 32], strides = [1, 1]} : vector<8x640xf32> to vector<8x32xf32>
    %157 = arith.mulf %156, %155 : vector<8x32xf32>
    %158 = arith.addf %151, %157 : vector<8x32xf32>
    %159 = vector.extract_strided_slice %0 {offsets = [0, 46], sizes = [8, 2], strides = [1, 1]} : vector<8x64xf32> to vector<8x2xf32>
    %160 = vector.extract_strided_slice %147 {offsets = [0, 0], sizes = [8, 6], strides = [1, 1]} : vector<8x8xf32> to vector<8x6xf32>
    %161 = tpu.concatenate %159, %160 in 1 : vector<8x2xf32>, vector<8x6xf32> -> vector<8x8xf32>
    %162 = tpu.concatenate %161, %161, %161, %161 in 1 : vector<8x8xf32>, vector<8x8xf32>, vector<8x8xf32>, vector<8x8xf32> -> vector<8x32xf32>
    %163 = vector.extract_strided_slice %80 {offsets = [0, 384], sizes = [8, 32], strides = [1, 1]} : vector<8x640xf32> to vector<8x32xf32>
    %164 = arith.mulf %163, %162 : vector<8x32xf32>
    %165 = arith.addf %158, %164 : vector<8x32xf32>
    %166 = vector.extract_strided_slice %0 {offsets = [0, 45], sizes = [8, 3], strides = [1, 1]} : vector<8x64xf32> to vector<8x3xf32>
    %167 = vector.extract_strided_slice %147 {offsets = [0, 0], sizes = [8, 5], strides = [1, 1]} : vector<8x8xf32> to vector<8x5xf32>
    %168 = tpu.concatenate %166, %167 in 1 : vector<8x3xf32>, vector<8x5xf32> -> vector<8x8xf32>
    %169 = tpu.concatenate %168, %168, %168, %168 in 1 : vector<8x8xf32>, vector<8x8xf32>, vector<8x8xf32>, vector<8x8xf32> -> vector<8x32xf32>
    %170 = vector.extract_strided_slice %80 {offsets = [0, 416], sizes = [8, 32], strides = [1, 1]} : vector<8x640xf32> to vector<8x32xf32>
    %171 = arith.mulf %170, %169 : vector<8x32xf32>
    %172 = arith.addf %165, %171 : vector<8x32xf32>
    %173 = vector.extract_strided_slice %0 {offsets = [0, 44], sizes = [8, 4], strides = [1, 1]} : vector<8x64xf32> to vector<8x4xf32>
    %174 = vector.extract_strided_slice %147 {offsets = [0, 0], sizes = [8, 4], strides = [1, 1]} : vector<8x8xf32> to vector<8x4xf32>
    %175 = tpu.concatenate %173, %174 in 1 : vector<8x4xf32>, vector<8x4xf32> -> vector<8x8xf32>
    %176 = tpu.concatenate %175, %175, %175, %175 in 1 : vector<8x8xf32>, vector<8x8xf32>, vector<8x8xf32>, vector<8x8xf32> -> vector<8x32xf32>
    %177 = vector.extract_strided_slice %80 {offsets = [0, 448], sizes = [8, 32], strides = [1, 1]} : vector<8x640xf32> to vector<8x32xf32>
    %178 = arith.mulf %177, %176 : vector<8x32xf32>
    %179 = arith.addf %172, %178 : vector<8x32xf32>
    %180 = vector.extract_strided_slice %75 {offsets = [0, 24], sizes = [8, 8], strides = [1, 1]} : vector<8x32xf32> to vector<8x8xf32>
    %181 = tpu.concatenate %180, %180, %180, %180 in 1 : vector<8x8xf32>, vector<8x8xf32>, vector<8x8xf32>, vector<8x8xf32> -> vector<8x32xf32>
    %182 = vector.extract_strided_slice %80 {offsets = [0, 480], sizes = [8, 32], strides = [1, 1]} : vector<8x640xf32> to vector<8x32xf32>
    %183 = arith.mulf %182, %181 : vector<8x32xf32>
    %184 = arith.addf %179, %183 : vector<8x32xf32>
    %185 = vector.extract_strided_slice %0 {offsets = [0, 63], sizes = [8, 1], strides = [1, 1]} : vector<8x64xf32> to vector<8x1xf32>
    %186 = vector.extract_strided_slice %180 {offsets = [0, 0], sizes = [8, 7], strides = [1, 1]} : vector<8x8xf32> to vector<8x7xf32>
    %187 = tpu.concatenate %185, %186 in 1 : vector<8x1xf32>, vector<8x7xf32> -> vector<8x8xf32>
    %188 = tpu.concatenate %187, %187, %187, %187 in 1 : vector<8x8xf32>, vector<8x8xf32>, vector<8x8xf32>, vector<8x8xf32> -> vector<8x32xf32>
    %189 = vector.extract_strided_slice %80 {offsets = [0, 512], sizes = [8, 32], strides = [1, 1]} : vector<8x640xf32> to vector<8x32xf32>
    %190 = arith.mulf %189, %188 : vector<8x32xf32>
    %191 = arith.addf %184, %190 : vector<8x32xf32>
    %192 = vector.extract_strided_slice %0 {offsets = [0, 62], sizes = [8, 2], strides = [1, 1]} : vector<8x64xf32> to vector<8x2xf32>
    %193 = vector.extract_strided_slice %180 {offsets = [0, 0], sizes = [8, 6], strides = [1, 1]} : vector<8x8xf32> to vector<8x6xf32>
    %194 = tpu.concatenate %192, %193 in 1 : vector<8x2xf32>, vector<8x6xf32> -> vector<8x8xf32>
    %195 = tpu.concatenate %194, %194, %194, %194 in 1 : vector<8x8xf32>, vector<8x8xf32>, vector<8x8xf32>, vector<8x8xf32> -> vector<8x32xf32>
    %196 = vector.extract_strided_slice %80 {offsets = [0, 544], sizes = [8, 32], strides = [1, 1]} : vector<8x640xf32> to vector<8x32xf32>
    %197 = arith.mulf %196, %195 : vector<8x32xf32>
    %198 = arith.addf %191, %197 : vector<8x32xf32>
    %199 = vector.extract_strided_slice %0 {offsets = [0, 61], sizes = [8, 3], strides = [1, 1]} : vector<8x64xf32> to vector<8x3xf32>
    %200 = vector.extract_strided_slice %180 {offsets = [0, 0], sizes = [8, 5], strides = [1, 1]} : vector<8x8xf32> to vector<8x5xf32>
    %201 = tpu.concatenate %199, %200 in 1 : vector<8x3xf32>, vector<8x5xf32> -> vector<8x8xf32>
    %202 = tpu.concatenate %201, %201, %201, %201 in 1 : vector<8x8xf32>, vector<8x8xf32>, vector<8x8xf32>, vector<8x8xf32> -> vector<8x32xf32>
    %203 = vector.extract_strided_slice %80 {offsets = [0, 576], sizes = [8, 32], strides = [1, 1]} : vector<8x640xf32> to vector<8x32xf32>
    %204 = arith.mulf %203, %202 : vector<8x32xf32>
    %205 = arith.addf %198, %204 : vector<8x32xf32>
    %206 = vector.extract_strided_slice %0 {offsets = [0, 60], sizes = [8, 4], strides = [1, 1]} : vector<8x64xf32> to vector<8x4xf32>
    %207 = vector.extract_strided_slice %180 {offsets = [0, 0], sizes = [8, 4], strides = [1, 1]} : vector<8x8xf32> to vector<8x4xf32>
    %208 = tpu.concatenate %206, %207 in 1 : vector<8x4xf32>, vector<8x4xf32> -> vector<8x8xf32>
    %209 = tpu.concatenate %208, %208, %208, %208 in 1 : vector<8x8xf32>, vector<8x8xf32>, vector<8x8xf32>, vector<8x8xf32> -> vector<8x32xf32>
    %210 = vector.extract_strided_slice %80 {offsets = [0, 608], sizes = [8, 32], strides = [1, 1]} : vector<8x640xf32> to vector<8x32xf32>
    %211 = arith.mulf %210, %209 : vector<8x32xf32>
    %212 = arith.addf %205, %211 : vector<8x32xf32>
    %213 = vector.shape_cast %212 : vector<8x32xf32> to vector<2x4x32xf32>
    %214 = vector.extract_strided_slice %213 {offsets = [0, 0, 0], sizes = [2, 1, 32], strides = [1, 1, 1]} : vector<2x4x32xf32> to vector<2x1x32xf32>
    %215 = vector.shape_cast %214 : vector<2x1x32xf32> to vector<2x32xf32>
    %216 = vector.extract_strided_slice %213 {offsets = [0, 1, 0], sizes = [2, 1, 32], strides = [1, 1, 1]} : vector<2x4x32xf32> to vector<2x1x32xf32>
    %217 = vector.shape_cast %216 : vector<2x1x32xf32> to vector<2x32xf32>
    %218 = vector.extract_strided_slice %213 {offsets = [0, 2, 0], sizes = [2, 1, 32], strides = [1, 1, 1]} : vector<2x4x32xf32> to vector<2x1x32xf32>
    %219 = vector.shape_cast %218 : vector<2x1x32xf32> to vector<2x32xf32>
    %220 = vector.extract_strided_slice %213 {offsets = [0, 3, 0], sizes = [2, 1, 32], strides = [1, 1, 1]} : vector<2x4x32xf32> to vector<2x1x32xf32>
    %221 = vector.shape_cast %220 : vector<2x1x32xf32> to vector<2x32xf32>
    %222 = tpu.concatenate %215, %217, %219, %221 in 1 : vector<2x32xf32>, vector<2x32xf32>, vector<2x32xf32>, vector<2x32xf32> -> vector<2x128xf32>
    %c0_35 = arith.constant 0 : index
    %c0_36 = arith.constant 0 : index
    %223 = vector.load %arg4[%c0_35, %c0_36] : memref<2x128xf32, #tpu.memory_space<vmem>>, vector<2x128xf32>
    tpu.vector_store %arg4[%c0_35, %c0_36], %222 {strides = array<i32>} : memref<2x128xf32, #tpu.memory_space<vmem>>, vector<2x128xf32>,
    return
  }
  func.func @transform_0(%arg0: i32) -> (i32, i32) {
    %c0_i32 = arith.constant 0 : i32
    %c0_i32_0 = arith.constant 0 : i32
    return %arg0, %c0_i32 : i32, i32
  }
  func.func @transform_1(%arg0: i32) -> (i32, i32) {
    %c0_i32 = arith.constant 0 : i32
    %c0_i32_0 = arith.constant 0 : i32
    %c0_i32_1 = arith.constant 0 : i32
    return %c0_i32, %c0_i32_0 : i32, i32
  }
  func.func @transform_2(%arg0: i32) -> (i32, i32) {
    %c0_i32 = arith.constant 0 : i32
    %c0_i32_0 = arith.constant 0 : i32
    return %arg0, %c0_i32 : i32, i32
  }
  func.func @transform_3(%arg0: i32) -> (i32, i32) {
    %c0_i32 = arith.constant 0 : i32
    %c0_i32_0 = arith.constant 0 : i32
    return %arg0, %c0_i32 : i32, i32
  }
}

</mosaic_0001>

<llo_original>
// kernel: lift_tsmixer_forward.1
$region0: #{lift_tsmixer_forward.1}
  #allocation0 [shape = 'u32[]', space=smem, size = 0x4, offset = 0x4, fixed_abs, tag = 'smem constant byte address 0x4 - core index']
  #allocation1 [shape = 'u32[144,128]{1,0:T(1,128)}', space=vmem, size = 0x12000, scoped, tag = 'internal scratch']
  %s0 = inlined_call_operand.vmem [shape: f32[8,64], index: 0, kind: input, shape index: {}]
  %s1 = inlined_call_operand.vmem [shape: bf16[1760,512], index: 1, kind: input, shape index: {}]
  %s2 = inlined_call_operand.vmem [shape: f32[8,640], index: 2, kind: input, shape index: {}]
  %s3 = inlined_call_operand.vmem [shape: f32[2,128], index: 3, kind: output, shape index: {}]
  %s4 = sld [smem:[#allocation0]]
  $region22: #{lift_tsmixer_forward.1} parent=0
    _
  %s6 = ssub.s32 1, %s4
  %s7 = scalar_select 0, %s6, %s4
  // Predicated region
  $region2: #{lift_tsmixer_forward.1} parent=0 // pred_check
    _
  $region3: #{lift_tsmixer_forward.1} parent=0 // pred_check_branch
    %9 = sbr.rel (0) target = $region5
  $region4: #{lift_tsmixer_forward.1} parent=0 // pred_region
    _
  $region5: #{lift_tsmixer_forward.1} parent=0 // pred_fallthru
    _
  // Predicated region
  $region6: #{lift_tsmixer_forward.1} parent=0 // pred_check
    _
  $region7: #{lift_tsmixer_forward.1} parent=0 // pred_check_branch
    %11 = sbr.rel (0) target = $region9
  $region8: #{lift_tsmixer_forward.1} parent=0 // pred_region
    _
  $region9: #{lift_tsmixer_forward.1} parent=0 // pred_fallthru
    _
  // Predicated region
  $region10: #{lift_tsmixer_forward.1} parent=0 // pred_check
    _
  $region11: #{lift_tsmixer_forward.1} parent=0 // pred_check_branch
    %13 = sbr.rel (0) target = $region13
  $region12: #{lift_tsmixer_forward.1} parent=0 // pred_region
    _
  $region13: #{lift_tsmixer_forward.1} parent=0 // pred_fallthru
    _
  %v15 = vld [vmem:[%s0] sm:$0xff]
  %v16 = vpack.c.bf16 %v15, %v15
  %v17 = vld [vmem:[%s1] sm:$0xf]
  %v18 = vld [vmem:[%s1 + $0x10] sm:$0xf]
  %v19 = vld [vmem:[%s1 + $0x20] sm:$0xf]
  %v20 = vld [vmem:[%s1 + $0x30] sm:$0xf]
  %v21 = vld [vmem:[%s1 + $0x40] sm:$0xf]
  %v22 = vld [vmem:[%s1 + $0x50] sm:$0xf]
  %v23 = vld [vmem:[%s1 + $0x60] sm:$0xf]
  %v24 = vld [vmem:[%s1 + $0x70] sm:$0xf]
  %v25 = vld [vmem:[%s1 + $0x80] sm:$0x1]
  %v26 = vunpack.c.l.bf16 %v25
  %v27 = vlaneseq
  %v28 = vshrl.u32 %v27, 7
  %v29 = vsub.s32 0, %v28
  %v30 = vrot.slane %v26, %v29
  %v39 = vunpack.c.l.b16 %v17
  %v40 = vunpack.c.l.b16 %v18
  %v41 = vunpack.c.l.b16 %v19
  %v42 = vunpack.c.l.b16 %v20
  %v43 = vunpack.c.l.b16 %v21
  %v44 = vunpack.c.l.b16 %v22
  %v45 = vunpack.c.l.b16 %v23
  %v46 = vunpack.c.l.b16 %v24
  %v47 = vpack.c.b16 %v40, %v39
  %v48 = vpack.c.b16 %v42, %v41
  %v49 = vpack.c.b16 %v44, %v43
  %v50 = vpack.c.b16 %v46, %v45
  %vm55 = vcmask 523264
  %v57 = vsel %vm55, %v16, 0
  %59 = vmatprep.subr.bf16.mxu0 0
  %60 = vmatpush1.bf16.msra.mxu0 %v47
  %61 = vmatprep.subr.bf16.mxu0 0
  %62 = vmatpush1.bf16.msra.mxu0 %v48
  %63 = vmatprep.subr.bf16.mxu0 0
  %64 = vmatpush1.bf16.msra.mxu0 %v49
  %65 = vmatprep.subr.bf16.mxu0 0
  %66 = vmatpush1.bf16.msra.mxu0 %v50
  %67 = vmatprep.subr.bf16.mxu0 0
  %68 = vmatpush1.bf16.msra.mxu0 0
  %69 = vmatprep.subr.bf16.mxu0 0
  %70 = vmatpush1.bf16.msra.mxu0 0
  %71 = vmatprep.subr.bf16.mxu0 0
  %72 = vmatpush1.bf16.msra.mxu0 0
  %73 = vmatprep.subr.bf16.mxu0 0
  %74 = vmatpush1.bf16.msra.mxu0 0
  %75 = vmatprep.subr.bf16.mxu0 0
  %76 = vmatpush1.bf16.msra.mxu0 0
  %77 = vmatprep.subr.bf16.mxu0 0
  %78 = vmatpush1.bf16.msra.mxu0 0
  %79 = vmatprep.subr.bf16.mxu0 0
  %80 = vmatpush1.bf16.msra.mxu0 0
  %81 = vmatprep.subr.bf16.mxu0 0
  %82 = vmatpush1.bf16.msra.mxu0 0
  %83 = vmatprep.subr.bf16.mxu0 0
  %84 = vmatpush1.bf16.msra.mxu0 0
  %85 = vmatprep.subr.bf16.mxu0 0
  %86 = vmatpush1.bf16.msra.mxu0 0
  %87 = vmatprep.subr.bf16.mxu0 0
  %88 = vmatpush1.bf16.msra.mxu0 0
  %89 = vmatprep.subr.bf16.mxu0 0
  %90 = vmatpush1.bf16.msra.mxu0 0
  %91 = vmatprep.mubr.bf16.mxu0 0
  %92 = vmatmul.mubr.bf16.gmra.mrb[0].mxu0 %v57
  %v93 = vpop.f32.mrb[0].mxu0
  %v94 = vadd.f32 %v30, %v93
  %v95 = vpop.f32.mrb[0].mxu0
  %v96 = vpop.f32.mrb[0].mxu0
  %v97 = vpop.f32.mrb[0].mxu0
  %98 = vdwg.mxu0
  %v99 = vmax.f32 %v94, 0.0
  %v100 = vpack.c.bf16 %v99, %v99
  %v101 = vld [vmem:[%s1 + $0xa0] sm:$0xf]
  %v102 = vld [vmem:[%s1 + $0xb0] sm:$0xf]
  %v103 = vld [vmem:[%s1 + $0xc0] sm:$0xf]
  %v104 = vld [vmem:[%s1 + $0xd0] sm:$0xf]
  %v105 = vld [vmem:[%s1 + $0xe0] sm:$0xf]
  %v106 = vld [vmem:[%s1 + $0xf0] sm:$0xf]
  %v107 = vld [vmem:[%s1 + $0x100] sm:$0xf]
  %v108 = vld [vmem:[%s1 + $0x110] sm:$0xf]
  %v109 = vld [vmem:[%s1 + $0x120] sm:$0xf]
  %v110 = vld [vmem:[%s1 + $0x130] sm:$0xf]
  %v111 = vld [vmem:[%s1 + $0x140] sm:$0xf]
  %v112 = vld [vmem:[%s1 + $0x150] sm:$0xf]
  %v113 = vld [vmem:[%s1 + $0x160] sm:$0xf]
  %v114 = vld [vmem:[%s1 + $0x170] sm:$0xf]
  %v115 = vld [vmem:[%s1 + $0x180] sm:$0xf]
  %v116 = vld [vmem:[%s1 + $0x190] sm:$0xf]
  %v133 = vunpack.c.l.b16 %v101
  %v134 = vunpack.c.l.b16 %v102
  %v135 = vunpack.c.l.b16 %v103
  %v136 = vunpack.c.l.b16 %v104
  %v137 = vunpack.c.l.b16 %v105
  %v138 = vunpack.c.l.b16 %v106
  %v139 = vunpack.c.l.b16 %v107
  %v140 = vunpack.c.l.b16 %v108
  %v141 = vunpack.c.l.b16 %v109
  %v142 = vunpack.c.l.b16 %v110
  %v143 = vunpack.c.l.b16 %v111
  %v144 = vunpack.c.l.b16 %v112
  %v145 = vunpack.c.l.b16 %v113
  %v146 = vunpack.c.l.b16 %v114
  %v147 = vunpack.c.l.b16 %v115
  %v148 = vunpack.c.l.b16 %v116
  %v149 = vpack.c.b16 %v134, %v133
  %v150 = vpack.c.b16 %v136, %v135
  %v151 = vpack.c.b16 %v138, %v137
  %v152 = vpack.c.b16 %v140, %v139
  %v153 = vpack.c.b16 %v142, %v141
  %v154 = vpack.c.b16 %v144, %v143
  %v155 = vpack.c.b16 %v146, %v145
  %v156 = vpack.c.b16 %v148, %v147
  %165 = vmatprep.subr.bf16.mxu0 0
  %166 = vmatpush1.bf16.msra.mxu0 %v149
  %167 = vmatprep.subr.bf16.mxu0 0
  %168 = vmatpush1.bf16.msra.mxu0 %v150
  %169 = vmatprep.subr.bf16.mxu0 0
  %170 = vmatpush1.bf16.msra.mxu0 %v151
  %171 = vmatprep.subr.bf16.mxu0 0
  %172 = vmatpush1.bf16.msra.mxu0 %v152
  %173 = vmatprep.subr.bf16.mxu0 0
  %174 = vmatpush1.bf16.msra.mxu0 %v153
  %175 = vmatprep.subr.bf16.mxu0 0
  %176 = vmatpush1.bf16.msra.mxu0 %v154
  %177 = vmatprep.subr.bf16.mxu0 0
  %178 = vmatpush1.bf16.msra.mxu0 %v155
  %179 = vmatprep.subr.bf16.mxu0 0
  %180 = vmatpush1.bf16.msra.mxu0 %v156
  %181 = vmatprep.subr.bf16.mxu0 0
  %182 = vmatpush1.bf16.msra.mxu0 0
  %183 = vmatprep.subr.bf16.mxu0 0
  %184 = vmatpush1.bf16.msra.mxu0 0
  %185 = vmatprep.subr.bf16.mxu0 0
  %186 = vmatpush1.bf16.msra.mxu0 0
  %187 = vmatprep.subr.bf16.mxu0 0
  %188 = vmatpush1.bf16.msra.mxu0 0
  %189 = vmatprep.subr.bf16.mxu0 0
  %190 = vmatpush1.bf16.msra.mxu0 0
  %191 = vmatprep.subr.bf16.mxu0 0
  %192 = vmatpush1.bf16.msra.mxu0 0
  %193 = vmatprep.subr.bf16.mxu0 0
  %194 = vmatpush1.bf16.msra.mxu0 0
  %195 = vmatprep.subr.bf16.mxu0 0
  %196 = vmatpush1.bf16.msra.mxu0 0
  %197 = vmatprep.mubr.bf16.mxu0 0
  %198 = vmatmul.mubr.bf16.gmra.mrb[0].mxu0 %v100
  %v199 = vpop.f32.mrb[0].mxu0
  %v200 = vadd.f32 0.0, %v199
  %v201 = vpop.f32.mrb[0].mxu0
  %v202 = vpop.f32.mrb[0].mxu0
  %v203 = vpop.f32.mrb[0].mxu0
  %204 = vdwg.mxu0
  %v205 = vadd.f32 %v15, %v200
  %v206 = vld [vmem:[%s1 + $0x1a0] sm:$0x1]
  %v207 = vunpack.c.l.bf16 %v206
  %v208 = vlaneseq
  %v209 = vshrl.u32 %v208, 7
  %v210 = vsub.s32 0, %v209
  %v211 = vrot.slane %v207, %v210
  %v212 = vadd.f32 %v205, %v211
  %v213 = vpack.c.bf16 %v212, %v212
  %v214 = vld [vmem:[%s1 + $0x1c0] sm:$0xff]
  %v215 = vld [vmem:[%s1 + $0x1c8] sm:$0xff]
  %v216 = vld [vmem:[%s1 + $0x1d0] sm:$0xff]
  %v217 = vld [vmem:[%s1 + $0x1d8] sm:$0xff]
  %v218 = vld [vmem:[%s1 + $0x1e0] sm:$0xff]
  %v219 = vld [vmem:[%s1 + $0x1e8] sm:$0xff]
  %v220 = vld [vmem:[%s1 + $0x1f0] sm:$0xff]
  %v221 = vld [vmem:[%s1 + $0x1f8] sm:$0xff]
  %v222 = vld [vmem:[%s1 + $0x200] sm:$0xff]
  %v223 = vld [vmem:[%s1 + $0x208] sm:$0xff]
  %v224 = vld [vmem:[%s1 + $0x210] sm:$0xff]
  %v225 = vld [vmem:[%s1 + $0x218] sm:$0xff]
  %v226 = vld [vmem:[%s1 + $0x220] sm:$0xff]
  %v227 = vld [vmem:[%s1 + $0x228] sm:$0xff]
  %v228 = vld [vmem:[%s1 + $0x230] sm:$0xff]
  %v229 = vld [vmem:[%s1 + $0x238] sm:$0xff]
  %v230 = vld [vmem:[%s1 + $0x240] sm:$0x11]
  %v231 = vld [vmem:[%s1 + $0x248] sm:$0x11]
  %v232 = vunpack.c.l.bf16 %v230
  %v233 = vunpack.c.h.bf16 %v230
  %v234 = vunpack.c.l.bf16 %v231
  %v235 = vunpack.c.h.bf16 %v231
  %v236 = vlaneseq
  %v237 = vshrl.u32 %v236, 7
  %v238 = vsub.s32 0, %v237
  %v239 = vrot.slane %v232, %v238
  %v240 = vlaneseq
  %v241 = vshrl.u32 %v240, 7
  %v242 = vsub.s32 0, %v241
  %v243 = vrot.slane %v233, %v242
  %v244 = vlaneseq
  %v245 = vshrl.u32 %v244, 7
  %v246 = vsub.s32 0, %v245
  %v247 = vrot.slane %v234, %v246
  %v248 = vlaneseq
  %v249 = vshrl.u32 %v248, 7
  %v250 = vsub.s32 0, %v249
  %v251 = vrot.slane %v235, %v250
  %v268 = vunpack.c.l.b16 %v214
  %v269 = vunpack.c.h.b16 %v214
  %v270 = vunpack.c.l.b16 %v215
  %v271 = vunpack.c.h.b16 %v215
  %v272 = vunpack.c.l.b16 %v216
  %v273 = vunpack.c.h.b16 %v216
  %v274 = vunpack.c.l.b16 %v217
  %v275 = vunpack.c.h.b16 %v217
  %v276 = vunpack.c.l.b16 %v218
  %v277 = vunpack.c.h.b16 %v218
  %v278 = vunpack.c.l.b16 %v219
  %v279 = vunpack.c.h.b16 %v219
  %v280 = vunpack.c.l.b16 %v220
  %v281 = vunpack.c.h.b16 %v220
  %v282 = vunpack.c.l.b16 %v221
  %v283 = vunpack.c.h.b16 %v221
  %v284 = vunpack.c.l.b16 %v222
  %v285 = vunpack.c.h.b16 %v222
  %v286 = vunpack.c.l.b16 %v223
  %v287 = vunpack.c.h.b16 %v223
  %v288 = vunpack.c.l.b16 %v224
  %v289 = vunpack.c.h.b16 %v224
  %v290 = vunpack.c.l.b16 %v225
  %v291 = vunpack.c.h.b16 %v225
  %v292 = vunpack.c.l.b16 %v226
  %v293 = vunpack.c.h.b16 %v226
  %v294 = vunpack.c.l.b16 %v227
  %v295 = vunpack.c.h.b16 %v227
  %v296 = vunpack.c.l.b16 %v228
  %v297 = vunpack.c.h.b16 %v228
  %v298 = vunpack.c.l.b16 %v229
  %v299 = vunpack.c.h.b16 %v229
  %v300 = vpack.c.b16 %v272, %v268
  %v301 = vpack.c.b16 %v273, %v269
  %v302 = vpack.c.b16 %v274, %v270
  %v303 = vpack.c.b16 %v275, %v271
  %v304 = vpack.c.b16 %v280, %v276
  %v305 = vpack.c.b16 %v281, %v277
  %v306 = vpack.c.b16 %v282, %v278
  %v307 = vpack.c.b16 %v283, %v279
  %v308 = vpack.c.b16 %v288, %v284
  %v309 = vpack.c.b16 %v289, %v285
  %v310 = vpack.c.b16 %v290, %v286
  %v311 = vpack.c.b16 %v291, %v287
  %v312 = vpack.c.b16 %v296, %v292
  %v313 = vpack.c.b16 %v297, %v293
  %v314 = vpack.c.b16 %v298, %v294
  %v315 = vpack.c.b16 %v299, %v295
  %v333 = vsel %vm55, %v213, 0
  %335 = vmatprep.subr.bf16.mxu0 %v301
  %336 = vmatpush1.bf16.msra.mxu0 %v300
  %337 = vmatprep.subr.bf16.mxu0 %v305
  %338 = vmatpush1.bf16.msra.mxu0 %v304
  %339 = vmatprep.subr.bf16.mxu0 %v309
  %340 = vmatpush1.bf16.msra.mxu0 %v308
  %341 = vmatprep.subr.bf16.mxu0 %v313
  %342 = vmatpush1.bf16.msra.mxu0 %v312
  %343 = vmatprep.subr.bf16.mxu0 0
  %344 = vmatpush1.bf16.msra.mxu0 0
  %345 = vmatprep.subr.bf16.mxu0 0
  %346 = vmatpush1.bf16.msra.mxu0 0
  %347 = vmatprep.subr.bf16.mxu0 0
  %348 = vmatpush1.bf16.msra.mxu0 0
  %349 = vmatprep.subr.bf16.mxu0 0
  %350 = vmatpush1.bf16.msra.mxu0 0
  %351 = vmatprep.subr.bf16.mxu0 0
  %352 = vmatpush1.bf16.msra.mxu0 0
  %353 = vmatprep.subr.bf16.mxu0 0
  %354 = vmatpush1.bf16.msra.mxu0 0
  %355 = vmatprep.subr.bf16.mxu0 0
  %356 = vmatpush1.bf16.msra.mxu0 0
  %357 = vmatprep.subr.bf16.mxu0 0
  %358 = vmatpush1.bf16.msra.mxu0 0
  %359 = vmatprep.subr.bf16.mxu0 0
  %360 = vmatpush1.bf16.msra.mxu0 0
  %361 = vmatprep.subr.bf16.mxu0 0
  %362 = vmatpush1.bf16.msra.mxu0 0
  %363 = vmatprep.subr.bf16.mxu0 0
  %364 = vmatpush1.bf16.msra.mxu0 0
  %365 = vmatprep.subr.bf16.mxu0 0
  %366 = vmatpush1.bf16.msra.mxu0 0
  %367 = vmatprep.mubr.bf16.mxu0 0
  %368 = vmatmul.mubr.bf16.gmra.mrb[0].mxu0 %v333
  %v369 = vpop.f32.mrb[0].mxu0
  %v370 = vadd.f32 %v239, %v369
  %v371 = vpop.f32.mrb[0].mxu0
  %v372 = vadd.f32 %v243, %v371
  %v373 = vpop.f32.mrb[0].mxu0
  %v374 = vpop.f32.mrb[0].mxu0
  %375 = vdwg.mxu0
  %376 = vmatprep.subr.bf16.mxu0 %v303
  %377 = vmatpush1.bf16.msra.mxu0 %v302
  %378 = vmatprep.subr.bf16.mxu0 %v307
  %379 = vmatpush1.bf16.msra.mxu0 %v306
  %380 = vmatprep.subr.bf16.mxu0 %v311
  %381 = vmatpush1.bf16.msra.mxu0 %v310
  %382 = vmatprep.subr.bf16.mxu0 %v315
  %383 = vmatpush1.bf16.msra.mxu0 %v314
  %384 = vmatprep.subr.bf16.mxu0 0
  %385 = vmatpush1.bf16.msra.mxu0 0
  %386 = vmatprep.subr.bf16.mxu0 0
  %387 = vmatpush1.bf16.msra.mxu0 0
  %388 = vmatprep.subr.bf16.mxu0 0
  %389 = vmatpush1.bf16.msra.mxu0 0
  %390 = vmatprep.subr.bf16.mxu0 0
  %391 = vmatpush1.bf16.msra.mxu0 0
  %392 = vmatprep.subr.bf16.mxu0 0
  %393 = vmatpush1.bf16.msra.mxu0 0
  %394 = vmatprep.subr.bf16.mxu0 0
  %395 = vmatpush1.bf16.msra.mxu0 0
  %396 = vmatprep.subr.bf16.mxu0 0
  %397 = vmatpush1.bf16.msra.mxu0 0
  %398 = vmatprep.subr.bf16.mxu0 0
  %399 = vmatpush1.bf16.msra.mxu0 0
  %400 = vmatprep.subr.bf16.mxu0 0
  %401 = vmatpush1.bf16.msra.mxu0 0
  %402 = vmatprep.subr.bf16.mxu0 0
  %403 = vmatpush1.bf16.msra.mxu0 0
  %404 = vmatprep.subr.bf16.mxu0 0
  %405 = vmatpush1.bf16.msra.mxu0 0
  %406 = vmatprep.subr.bf16.mxu0 0
  %407 = vmatpush1.bf16.msra.mxu0 0
  %408 = vmatprep.mubr.bf16.mxu0 0
  %409 = vmatmul.mubr.bf16.gmra.mrb[0].mxu0 %v333
  %v410 = vpop.f32.mrb[0].mxu0
  %v411 = vadd.f32 %v247, %v410
  %v412 = vpop.f32.mrb[0].mxu0
  %v413 = vadd.f32 %v251, %v412
  %v414 = vpop.f32.mrb[0].mxu0
  %v415 = vpop.f32.mrb[0].mxu0
  %416 = vdwg.mxu0
  %v417 = vmax.f32 %v370, 0.0
  %v418 = vmax.f32 %v372, 0.0
  %v419 = vmax.f32 %v411, 0.0
  %v420 = vmax.f32 %v413, 0.0
  %v421 = vpack.c.bf16 %v417, %v417
  %v422 = vpack.c.bf16 %v418, %v418
  %v423 = vpack.c.bf16 %v419, %v419
  %v424 = vpack.c.bf16 %v420, %v420
  %v425 = vld [vmem:[%s1 + $0x260] sm:$0xf]
  %v426 = vld [vmem:[%s1 + $0x270] sm:$0xf]
  %v427 = vld [vmem:[%s1 + $0x280] sm:$0xf]
  %v428 = vld [vmem:[%s1 + $0x290] sm:$0xf]
  %v429 = vld [vmem:[%s1 + $0x2a0] sm:$0xf]
  %v430 = vld [vmem:[%s1 + $0x2b0] sm:$0xf]
  %v431 = vld [vmem:[%s1 + $0x2c0] sm:$0xf]
  %v432 = vld [vmem:[%s1 + $0x2d0] sm:$0xf]
  %v433 = vld [vmem:[%s1 + $0x2e0] sm:$0xf]
  %v434 = vld [vmem:[%s1 + $0x2f0] sm:$0xf]
  %v435 = vld [vmem:[%s1 + $0x300] sm:$0xf]
  %v436 = vld [vmem:[%s1 + $0x310] sm:$0xf]
  %v437 = vld [vmem:[%s1 + $0x320] sm:$0xf]
  %v438 = vld [vmem:[%s1 + $0x330] sm:$0xf]
  %v439 = vld [vmem:[%s1 + $0x340] sm:$0xf]
  %v440 = vld [vmem:[%s1 + $0x350] sm:$0xf]
  %v441 = vld [vmem:[%s1 + $0x360] sm:$0xf]
  %v442 = vld [vmem:[%s1 + $0x370] sm:$0xf]
  %v443 = vld [vmem:[%s1 + $0x380] sm:$0xf]
  %v444 = vld [vmem:[%s1 + $0x390] sm:$0xf]
  %v445 = vld [vmem:[%s1 + $0x3a0] sm:$0xf]
  %v446 = vld [vmem:[%s1 + $0x3b0] sm:$0xf]
  %v447 = vld [vmem:[%s1 + $0x3c0] sm:$0xf]
  %v448 = vld [vmem:[%s1 + $0x3d0] sm:$0xf]
  %v449 = vld [vmem:[%s1 + $0x3e0] sm:$0xf]
  %v450 = vld [vmem:[%s1 + $0x3f0] sm:$0xf]
  %v451 = vld [vmem:[%s1 + $0x400] sm:$0xf]
  %v452 = vld [vmem:[%s1 + $0x410] sm:$0xf]
  %v453 = vld [vmem:[%s1 + $0x420] sm:$0xf]
  %v454 = vld [vmem:[%s1 + $0x430] sm:$0xf]
  %v455 = vld [vmem:[%s1 + $0x440] sm:$0xf]
  %v456 = vld [vmem:[%s1 + $0x450] sm:$0xf]
  %v457 = vld [vmem:[%s1 + $0x460] sm:$0xf]
  %v458 = vld [vmem:[%s1 + $0x470] sm:$0xf]
  %v459 = vld [vmem:[%s1 + $0x480] sm:$0xf]
  %v460 = vld [vmem:[%s1 + $0x490] sm:$0xf]
  %v461 = vld [vmem:[%s1 + $0x4a0] sm:$0xf]
  %v462 = vld [vmem:[%s1 + $0x4b0] sm:$0xf]
  %v463 = vld [vmem:[%s1 + $0x4c0] sm:$0xf]
  %v464 = vld [vmem:[%s1 + $0x4d0] sm:$0xf]
  %v465 = vld [vmem:[%s1 + $0x4e0] sm:$0xf]
  %v466 = vld [vmem:[%s1 + $0x4f0] sm:$0xf]
  %v467 = vld [vmem:[%s1 + $0x500] sm:$0xf]
  %v468 = vld [vmem:[%s1 + $0x510] sm:$0xf]
  %v469 = vld [vmem:[%s1 + $0x520] sm:$0xf]
  %v470 = vld [vmem:[%s1 + $0x530] sm:$0xf]
  %v471 = vld [vmem:[%s1 + $0x540] sm:$0xf]
  %v472 = vld [vmem:[%s1 + $0x550] sm:$0xf]
  %v473 = vld [vmem:[%s1 + $0x560] sm:$0xf]
  %v474 = vld [vmem:[%s1 + $0x570] sm:$0xf]
  %v475 = vld [vmem:[%s1 + $0x580] sm:$0xf]
  %v476 = vld [vmem:[%s1 + $0x590] sm:$0xf]
  %v477 = vld [vmem:[%s1 + $0x5a0] sm:$0xf]
  %v478 = vld [vmem:[%s1 + $0x5b0] sm:$0xf]
  %v479 = vld [vmem:[%s1 + $0x5c0] sm:$0xf]
  %v480 = vld [vmem:[%s1 + $0x5d0] sm:$0xf]
  %v481 = vld [vmem:[%s1 + $0x5e0] sm:$0xf]
  %v482 = vld [vmem:[%s1 + $0x5f0] sm:$0xf]
  %v483 = vld [vmem:[%s1 + $0x600] sm:$0xf]
  %v484 = vld [vmem:[%s1 + $0x610] sm:$0xf]
  %v485 = vld [vmem:[%s1 + $0x620] sm:$0xf]
  %v486 = vld [vmem:[%s1 + $0x630] sm:$0xf]
  %v487 = vld [vmem:[%s1 + $0x640] sm:$0xf]
  %v488 = vld [vmem:[%s1 + $0x650] sm:$0xf]
  %v553 = vunpack.c.l.b16 %v425
  %v554 = vunpack.c.l.b16 %v426
  %v555 = vunpack.c.l.b16 %v427
  %v556 = vunpack.c.l.b16 %v428
  %v557 = vunpack.c.l.b16 %v429
  %v558 = vunpack.c.l.b16 %v430
  %v559 = vunpack.c.l.b16 %v431
  %v560 = vunpack.c.l.b16 %v432
  %v561 = vunpack.c.l.b16 %v433
  %v562 = vunpack.c.l.b16 %v434
  %v563 = vunpack.c.l.b16 %v435
  %v564 = vunpack.c.l.b16 %v436
  %v565 = vunpack.c.l.b16 %v437
  %v566 = vunpack.c.l.b16 %v438
  %v567 = vunpack.c.l.b16 %v439
  %v568 = vunpack.c.l.b16 %v440
  %v569 = vunpack.c.l.b16 %v441
  %v570 = vunpack.c.l.b16 %v442
  %v571 = vunpack.c.l.b16 %v443
  %v572 = vunpack.c.l.b16 %v444
  %v573 = vunpack.c.l.b16 %v445
  %v574 = vunpack.c.l.b16 %v446
  %v575 = vunpack.c.l.b16 %v447
  %v576 = vunpack.c.l.b16 %v448
  %v577 = vunpack.c.l.b16 %v449
  %v578 = vunpack.c.l.b16 %v450
  %v579 = vunpack.c.l.b16 %v451
  %v580 = vunpack.c.l.b16 %v452
  %v581 = vunpack.c.l.b16 %v453
  %v582 = vunpack.c.l.b16 %v454
  %v583 = vunpack.c.l.b16 %v455
  %v584 = vunpack.c.l.b16 %v456
  %v585 = vunpack.c.l.b16 %v457
  %v586 = vunpack.c.l.b16 %v458
  %v587 = vunpack.c.l.b16 %v459
  %v588 = vunpack.c.l.b16 %v460
  %v589 = vunpack.c.l.b16 %v461
  %v590 = vunpack.c.l.b16 %v462
  %v591 = vunpack.c.l.b16 %v463
  %v592 = vunpack.c.l.b16 %v464
  %v593 = vunpack.c.l.b16 %v465
  %v594 = vunpack.c.l.b16 %v466
  %v595 = vunpack.c.l.b16 %v467
  %v596 = vunpack.c.l.b16 %v468
  %v597 = vunpack.c.l.b16 %v469
  %v598 = vunpack.c.l.b16 %v470
  %v599 = vunpack.c.l.b16 %v471
  %v600 = vunpack.c.l.b16 %v472
  %v601 = vunpack.c.l.b16 %v473
  %v602 = vunpack.c.l.b16 %v474
  %v603 = vunpack.c.l.b16 %v475
  %v604 = vunpack.c.l.b16 %v476
  %v605 = vunpack.c.l.b16 %v477
  %v606 = vunpack.c.l.b16 %v478
  %v607 = vunpack.c.l.b16 %v479
  %v608 = vunpack.c.l.b16 %v480
  %v609 = vunpack.c.l.b16 %v481
  %v610 = vunpack.c.l.b16 %v482
  %v611 = vunpack.c.l.b16 %v483
  %v612 = vunpack.c.l.b16 %v484
  %v613 = vunpack.c.l.b16 %v485
  %v614 = vunpack.c.l.b16 %v486
  %v615 = vunpack.c.l.b16 %v487
  %v616 = vunpack.c.l.b16 %v488
  %v617 = vpack.c.b16 %v554, %v553
  %v618 = vpack.c.b16 %v556, %v555
  %v619 = vpack.c.b16 %v558, %v557
  %v620 = vpack.c.b16 %v560, %v559
  %v621 = vpack.c.b16 %v562, %v561
  %v622 = vpack.c.b16 %v564, %v563
  %v623 = vpack.c.b16 %v566, %v565
  %v624 = vpack.c.b16 %v568, %v567
  %v625 = vpack.c.b16 %v570, %v569
  %v626 = vpack.c.b16 %v572, %v571
  %v627 = vpack.c.b16 %v574, %v573
  %v628 = vpack.c.b16 %v576, %v575
  %v629 = vpack.c.b16 %v578, %v577
  %v630 = vpack.c.b16 %v580, %v579
  %v631 = vpack.c.b16 %v582, %v581
  %v632 = vpack.c.b16 %v584, %v583
  %v633 = vpack.c.b16 %v586, %v585
  %v634 = vpack.c.b16 %v588, %v587
  %v635 = vpack.c.b16 %v590, %v589
  %v636 = vpack.c.b16 %v592, %v591
  %v637 = vpack.c.b16 %v594, %v593
  %v638 = vpack.c.b16 %v596, %v595
  %v639 = vpack.c.b16 %v598, %v597
  %v640 = vpack.c.b16 %v600, %v599
  %v641 = vpack.c.b16 %v602, %v601
  %v642 = vpack.c.b16 %v604, %v603
  %v643 = vpack.c.b16 %v606, %v605
  %v644 = vpack.c.b16 %v608, %v607
  %v645 = vpack.c.b16 %v610, %v609
  %v646 = vpack.c.b16 %v612, %v611
  %v647 = vpack.c.b16 %v614, %v613
  %v648 = vpack.c.b16 %v616, %v615
  %681 = vmatprep.subr.bf16.mxu0 0
  %682 = vmatpush1.bf16.msra.mxu0 %v617
  %683 = vmatprep.subr.bf16.mxu0 0
  %684 = vmatpush1.bf16.msra.mxu0 %v618
  %685 = vmatprep.subr.bf16.mxu0 0
  %686 = vmatpush1.bf16.msra.mxu0 %v619
  %687 = vmatprep.subr.bf16.mxu0 0
  %688 = vmatpush1.bf16.msra.mxu0 %v620
  %689 = vmatprep.subr.bf16.mxu0 0
  %690 = vmatpush1.bf16.msra.mxu0 %v621
  %691 = vmatprep.subr.bf16.mxu0 0
  %692 = vmatpush1.bf16.msra.mxu0 %v622
  %693 = vmatprep.subr.bf16.mxu0 0
  %694 = vmatpush1.bf16.msra.mxu0 %v623
  %695 = vmatprep.subr.bf16.mxu0 0
  %696 = vmatpush1.bf16.msra.mxu0 %v624
  %697 = vmatprep.subr.bf16.mxu0 0
  %698 = vmatpush1.bf16.msra.mxu0 %v625
  %699 = vmatprep.subr.bf16.mxu0 0
  %700 = vmatpush1.bf16.msra.mxu0 %v626
  %701 = vmatprep.subr.bf16.mxu0 0
  %702 = vmatpush1.bf16.msra.mxu0 %v627
  %703 = vmatprep.subr.bf16.mxu0 0
  %704 = vmatpush1.bf16.msra.mxu0 %v628
  %705 = vmatprep.subr.bf16.mxu0 0
  %706 = vmatpush1.bf16.msra.mxu0 %v629
  %707 = vmatprep.subr.bf16.mxu0 0
  %708 = vmatpush1.bf16.msra.mxu0 %v630
  %709 = vmatprep.subr.bf16.mxu0 0
  %710 = vmatpush1.bf16.msra.mxu0 %v631
  %711 = vmatprep.subr.bf16.mxu0 0
  %712 = vmatpush1.bf16.msra.mxu0 %v632
  %713 = vmatprep.mubr.bf16.mxu0 %v422
  %714 = vmatmul.mubr.bf16.gmra.mrb[0].mxu0 %v421
  %v715 = vpop.f32.mrb[0].mxu0
  %v716 = vadd.f32 0.0, %v715
  %v717 = vpop.f32.mrb[0].mxu0
  %v718 = vpop.f32.mrb[0].mxu0
  %v719 = vpop.f32.mrb[0].mxu0
  %720 = vdwg.mxu0
  %721 = vmatprep.subr.bf16.mxu0 0
  %722 = vmatpush1.bf16.msra.mxu0 %v633
  %723 = vmatprep.subr.bf16.mxu0 0
  %724 = vmatpush1.bf16.msra.mxu0 %v634
  %725 = vmatprep.subr.bf16.mxu0 0
  %726 = vmatpush1.bf16.msra.mxu0 %v635
  %727 = vmatprep.subr.bf16.mxu0 0
  %728 = vmatpush1.bf16.msra.mxu0 %v636
  %729 = vmatprep.subr.bf16.mxu0 0
  %730 = vmatpush1.bf16.msra.mxu0 %v637
  %731 = vmatprep.subr.bf16.mxu0 0
  %732 = vmatpush1.bf16.msra.mxu0 %v638
  %733 = vmatprep.subr.bf16.mxu0 0
  %734 = vmatpush1.bf16.msra.mxu0 %v639
  %735 = vmatprep.subr.bf16.mxu0 0
  %736 = vmatpush1.bf16.msra.mxu0 %v640
  %737 = vmatprep.subr.bf16.mxu0 0
  %738 = vmatpush1.bf16.msra.mxu0 %v641
  %739 = vmatprep.subr.bf16.mxu0 0
  %740 = vmatpush1.bf16.msra.mxu0 %v642
  %741 = vmatprep.subr.bf16.mxu0 0
  %742 = vmatpush1.bf16.msra.mxu0 %v643
  %743 = vmatprep.subr.bf16.mxu0 0
  %744 = vmatpush1.bf16.msra.mxu0 %v644
  %745 = vmatprep.subr.bf16.mxu0 0
  %746 = vmatpush1.bf16.msra.mxu0 %v645
  %747 = vmatprep.subr.bf16.mxu0 0
  %748 = vmatpush1.bf16.msra.mxu0 %v646
  %749 = vmatprep.subr.bf16.mxu0 0
  %750 = vmatpush1.bf16.msra.mxu0 %v647
  %751 = vmatprep.subr.bf16.mxu0 0
  %752 = vmatpush1.bf16.msra.mxu0 %v648
  %753 = vmatprep.mubr.bf16.mxu0 %v424
  %754 = vmatmul.mubr.bf16.gmra.mrb[0].mxu0 %v423
  %v755 = vpop.f32.mrb[0].mxu0
  %v756 = vadd.f32 %v716, %v755
  %v757 = vpop.f32.mrb[0].mxu0
  %v758 = vpop.f32.mrb[0].mxu0
  %v759 = vpop.f32.mrb[0].mxu0
  %760 = vdwg.mxu0
  %v761 = vadd.f32 %v212, %v756
  %v762 = vld [vmem:[%s1 + $0x660] sm:$0x1]
  %v763 = vunpack.c.l.bf16 %v762
  %v764 = vlaneseq
  %v765 = vshrl.u32 %v764, 7
  %v766 = vsub.s32 0, %v765
  %v767 = vrot.slane %v763, %v766
  %v768 = vadd.f32 %v761, %v767
  %v769 = vpack.c.bf16 %v768, %v768
  %v770 = vld [vmem:[%s1 + $0x680] sm:$0xf]
  %v771 = vld [vmem:[%s1 + $0x690] sm:$0xf]
  %v772 = vld [vmem:[%s1 + $0x6a0] sm:$0xf]
  %v773 = vld [vmem:[%s1 + $0x6b0] sm:$0xf]
  %v774 = vld [vmem:[%s1 + $0x6c0] sm:$0xf]
  %v775 = vld [vmem:[%s1 + $0x6d0] sm:$0xf]
  %v776 = vld [vmem:[%s1 + $0x6e0] sm:$0xf]
  %v777 = vld [vmem:[%s1 + $0x6f0] sm:$0xf]
  %v778 = vld [vmem:[%s1 + $0x700] sm:$0x1]
  %v779 = vunpack.c.l.bf16 %v778
  %v780 = vlaneseq
  %v781 = vshrl.u32 %v780, 7
  %v782 = vsub.s32 0, %v781
  %v783 = vrot.slane %v779, %v782
  %v792 = vunpack.c.l.b16 %v770
  %v793 = vunpack.c.l.b16 %v771
  %v794 = vunpack.c.l.b16 %v772
  %v795 = vunpack.c.l.b16 %v773
  %v796 = vunpack.c.l.b16 %v774
  %v797 = vunpack.c.l.b16 %v775
  %v798 = vunpack.c.l.b16 %v776
  %v799 = vunpack.c.l.b16 %v777
  %v800 = vpack.c.b16 %v793, %v792
  %v801 = vpack.c.b16 %v795, %v794
  %v802 = vpack.c.b16 %v797, %v796
  %v803 = vpack.c.b16 %v799, %v798
  %v809 = vsel %vm55, %v769, 0
  %811 = vmatprep.subr.bf16.mxu0 0
  %812 = vmatpush1.bf16.msra.mxu0 %v800
  %813 = vmatprep.subr.bf16.mxu0 0
  %814 = vmatpush1.bf16.msra.mxu0 %v801
  %815 = vmatprep.subr.bf16.mxu0 0
  %816 = vmatpush1.bf16.msra.mxu0 %v802
  %817 = vmatprep.subr.bf16.mxu0 0
  %818 = vmatpush1.bf16.msra.mxu0 %v803
  %819 = vmatprep.subr.bf16.mxu0 0
  %820 = vmatpush1.bf16.msra.mxu0 0
  %821 = vmatprep.subr.bf16.mxu0 0
  %822 = vmatpush1.bf16.msra.mxu0 0
  %823 = vmatprep.subr.bf16.mxu0 0
  %824 = vmatpush1.bf16.msra.mxu0 0
  %825 = vmatprep.subr.bf16.mxu0 0
  %826 = vmatpush1.bf16.msra.mxu0 0
  %827 = vmatprep.subr.bf16.mxu0 0
  %828 = vmatpush1.bf16.msra.mxu0 0
  %829 = vmatprep.subr.bf16.mxu0 0
  %830 = vmatpush1.bf16.msra.mxu0 0
  %831 = vmatprep.subr.bf16.mxu0 0
  %832 = vmatpush1.bf16.msra.mxu0 0
  %833 = vmatprep.subr.bf16.mxu0 0
  %834 = vmatpush1.bf16.msra.mxu0 0
  %835 = vmatprep.subr.bf16.mxu0 0
  %836 = vmatpush1.bf16.msra.mxu0 0
  %837 = vmatprep.subr.bf16.mxu0 0
  %838 = vmatpush1.bf16.msra.mxu0 0
  %839 = vmatprep.subr.bf16.mxu0 0
  %840 = vmatpush1.bf16.msra.mxu0 0
  %841 = vmatprep.subr.bf16.mxu0 0
  %842 = vmatpush1.bf16.msra.mxu0 0
  %843 = vmatprep.mubr.bf16.mxu0 0
  %844 = vmatmul.mubr.bf16.gmra.mrb[0].mxu0 %v809
  %v845 = vpop.f32.mrb[0].mxu0
  %v846 = vadd.f32 %v783, %v845
  %v847 = vpop.f32.mrb[0].mxu0
  %v848 = vpop.f32.mrb[0].mxu0
  %v849 = vpop.f32.mrb[0].mxu0
  %850 = vdwg.mxu0
  %v851 = vmax.f32 %v846, 0.0
  %v852 = vpack.c.bf16 %v851, %v851
  %v853 = vld [vmem:[%s1 + $0x720] sm:$0xf]
  %v854 = vld [vmem:[%s1 + $0x730] sm:$0xf]
  %v855 = vld [vmem:[%s1 + $0x740] sm:$0xf]
  %v856 = vld [vmem:[%s1 + $0x750] sm:$0xf]
  %v857 = vld [vmem:[%s1 + $0x760] sm:$0xf]
  %v858 = vld [vmem:[%s1 + $0x770] sm:$0xf]
  %v859 = vld [vmem:[%s1 + $0x780] sm:$0xf]
  %v860 = vld [vmem:[%s1 + $0x790] sm:$0xf]
  %v861 = vld [vmem:[%s1 + $0x7a0] sm:$0xf]
  %v862 = vld [vmem:[%s1 + $0x7b0] sm:$0xf]
  %v863 = vld [vmem:[%s1 + $0x7c0] sm:$0xf]
  %v864 = vld [vmem:[%s1 + $0x7d0] sm:$0xf]
  %v865 = vld [vmem:[%s1 + $0x7e0] sm:$0xf]
  %v866 = vld [vmem:[%s1 + $0x7f0] sm:$0xf]
  %v867 = vld [vmem:[%s1 + $0x800] sm:$0xf]
  %v868 = vld [vmem:[%s1 + $0x810] sm:$0xf]
  %v885 = vunpack.c.l.b16 %v853
  %v886 = vunpack.c.l.b16 %v854
  %v887 = vunpack.c.l.b16 %v855
  %v888 = vunpack.c.l.b16 %v856
  %v889 = vunpack.c.l.b16 %v857
  %v890 = vunpack.c.l.b16 %v858
  %v891 = vunpack.c.l.b16 %v859
  %v892 = vunpack.c.l.b16 %v860
  %v893 = vunpack.c.l.b16 %v861
  %v894 = vunpack.c.l.b16 %v862
  %v895 = vunpack.c.l.b16 %v863
  %v896 = vunpack.c.l.b16 %v864
  %v897 = vunpack.c.l.b16 %v865
  %v898 = vunpack.c.l.b16 %v866
  %v899 = vunpack.c.l.b16 %v867
  %v900 = vunpack.c.l.b16 %v868
  %v901 = vpack.c.b16 %v886, %v885
  %v902 = vpack.c.b16 %v888, %v887
  %v903 = vpack.c.b16 %v890, %v889
  %v904 = vpack.c.b16 %v892, %v891
  %v905 = vpack.c.b16 %v894, %v893
  %v906 = vpack.c.b16 %v896, %v895
  %v907 = vpack.c.b16 %v898, %v897
  %v908 = vpack.c.b16 %v900, %v899
  %917 = vmatprep.subr.bf16.mxu0 0
  %918 = vmatpush1.bf16.msra.mxu0 %v901
  %919 = vmatprep.subr.bf16.mxu0 0
  %920 = vmatpush1.bf16.msra.mxu0 %v902
  %921 = vmatprep.subr.bf16.mxu0 0
  %922 = vmatpush1.bf16.msra.mxu0 %v903
  %923 = vmatprep.subr.bf16.mxu0 0
  %924 = vmatpush1.bf16.msra.mxu0 %v904
  %925 = vmatprep.subr.bf16.mxu0 0
  %926 = vmatpush1.bf16.msra.mxu0 %v905
  %927 = vmatprep.subr.bf16.mxu0 0
  %928 = vmatpush1.bf16.msra.mxu0 %v906
  %929 = vmatprep.subr.bf16.mxu0 0
  %930 = vmatpush1.bf16.msra.mxu0 %v907
  %931 = vmatprep.subr.bf16.mxu0 0
  %932 = vmatpush1.bf16.msra.mxu0 %v908
  %933 = vmatprep.subr.bf16.mxu0 0
  %934 = vmatpush1.bf16.msra.mxu0 0
  %935 = vmatprep.subr.bf16.mxu0 0
  %936 = vmatpush1.bf16.msra.mxu0 0
  %937 = vmatprep.subr.bf16.mxu0 0
  %938 = vmatpush1.bf16.msra.mxu0 0
  %939 = vmatprep.subr.bf16.mxu0 0
  %940 = vmatpush1.bf16.msra.mxu0 0
  %941 = vmatprep.subr.bf16.mxu0 0
  %942 = vmatpush1.bf16.msra.mxu0 0
  %943 = vmatprep.subr.bf16.mxu0 0
  %944 = vmatpush1.bf16.msra.mxu0 0
  %945 = vmatprep.subr.bf16.mxu0 0
  %946 = vmatpush1.bf16.msra.mxu0 0
  %947 = vmatprep.subr.bf16.mxu0 0
  %948 = vmatpush1.bf16.msra.mxu0 0
  %949 = vmatprep.mubr.bf16.mxu0 0
  %950 = vmatmul.mubr.bf16.gmra.mrb[0].mxu0 %v852
  %v951 = vpop.f32.mrb[0].mxu0
  %v952 = vadd.f32 0.0, %v951
  %v953 = vpop.f32.mrb[0].mxu0
  %v954 = vpop.f32.mrb[0].mxu0
  %v955 = vpop.f32.mrb[0].mxu0
  %956 = vdwg.mxu0
  %v957 = vadd.f32 %v768, %v952
  %v958 = vld [vmem:[%s1 + $0x820] sm:$0x1]
  %v959 = vunpack.c.l.bf16 %v958
  %v960 = vlaneseq
  %v961 = vshrl.u32 %v960, 7
  %v962 = vsub.s32 0, %v961
  %v963 = vrot.slane %v959, %v962
  %v964 = vadd.f32 %v957, %v963
  %v965 = vpack.c.bf16 %v964, %v964
  %v966 = vld [vmem:[%s1 + $0x840] sm:$0xff]
  %v967 = vld [vmem:[%s1 + $0x848] sm:$0xff]
  %v968 = vld [vmem:[%s1 + $0x850] sm:$0xff]
  %v969 = vld [vmem:[%s1 + $0x858] sm:$0xff]
  %v970 = vld [vmem:[%s1 + $0x860] sm:$0xff]
  %v971 = vld [vmem:[%s1 + $0x868] sm:$0xff]
  %v972 = vld [vmem:[%s1 + $0x870] sm:$0xff]
  %v973 = vld [vmem:[%s1 + $0x878] sm:$0xff]
  %v974 = vld [vmem:[%s1 + $0x880] sm:$0xff]
  %v975 = vld [vmem:[%s1 + $0x888] sm:$0xff]
  %v976 = vld [vmem:[%s1 + $0x890] sm:$0xff]
  %v977 = vld [vmem:[%s1 + $0x898] sm:$0xff]
  %v978 = vld [vmem:[%s1 + $0x8a0] sm:$0xff]
  %v979 = vld [vmem:[%s1 + $0x8a8] sm:$0xff]
  %v980 = vld [vmem:[%s1 + $0x8b0] sm:$0xff]
  %v981 = vld [vmem:[%s1 + $0x8b8] sm:$0xff]
  %v982 = vld [vmem:[%s1 + $0x8c0] sm:$0x11]
  %v983 = vld [vmem:[%s1 + $0x8c8] sm:$0x11]
  %v984 = vunpack.c.l.bf16 %v982
  %v985 = vunpack.c.h.bf16 %v982
  %v986 = vunpack.c.l.bf16 %v983
  %v987 = vunpack.c.h.bf16 %v983
  %v988 = vlaneseq
  %v989 = vshrl.u32 %v988, 7
  %v990 = vsub.s32 0, %v989
  %v991 = vrot.slane %v984, %v990
  %v992 = vlaneseq
  %v993 = vshrl.u32 %v992, 7
  %v994 = vsub.s32 0, %v993
  %v995 = vrot.slane %v985, %v994
  %v996 = vlaneseq
  %v997 = vshrl.u32 %v996, 7
  %v998 = vsub.s32 0, %v997
  %v999 = vrot.slane %v986, %v998
  %v1000 = vlaneseq
  %v1001 = vshrl.u32 %v1000, 7
  %v1002 = vsub.s32 0, %v1001
  %v1003 = vrot.slane %v987, %v1002
  %v1020 = vunpack.c.l.b16 %v966
  %v1021 = vunpack.c.h.b16 %v966
  %v1022 = vunpack.c.l.b16 %v967
  %v1023 = vunpack.c.h.b16 %v967
  %v1024 = vunpack.c.l.b16 %v968
  %v1025 = vunpack.c.h.b16 %v968
  %v1026 = vunpack.c.l.b16 %v969
  %v1027 = vunpack.c.h.b16 %v969
  %v1028 = vunpack.c.l.b16 %v970
  %v1029 = vunpack.c.h.b16 %v970
  %v1030 = vunpack.c.l.b16 %v971
  %v1031 = vunpack.c.h.b16 %v971
  %v1032 = vunpack.c.l.b16 %v972
  %v1033 = vunpack.c.h.b16 %v972
  %v1034 = vunpack.c.l.b16 %v973
  %v1035 = vunpack.c.h.b16 %v973
  %v1036 = vunpack.c.l.b16 %v974
  %v1037 = vunpack.c.h.b16 %v974
  %v1038 = vunpack.c.l.b16 %v975
  %v1039 = vunpack.c.h.b16 %v975
  %v1040 = vunpack.c.l.b16 %v976
  %v1041 = vunpack.c.h.b16 %v976
  %v1042 = vunpack.c.l.b16 %v977
  %v1043 = vunpack.c.h.b16 %v977
  %v1044 = vunpack.c.l.b16 %v978
  %v1045 = vunpack.c.h.b16 %v978
  %v1046 = vunpack.c.l.b16 %v979
  %v1047 = vunpack.c.h.b16 %v979
  %v1048 = vunpack.c.l.b16 %v980
  %v1049 = vunpack.c.h.b16 %v980
  %v1050 = vunpack.c.l.b16 %v981
  %v1051 = vunpack.c.h.b16 %v981
  %v1052 = vpack.c.b16 %v1024, %v1020
  %v1053 = vpack.c.b16 %v1025, %v1021
  %v1054 = vpack.c.b16 %v1026, %v1022
  %v1055 = vpack.c.b16 %v1027, %v1023
  %v1056 = vpack.c.b16 %v1032, %v1028
  %v1057 = vpack.c.b16 %v1033, %v1029
  %v1058 = vpack.c.b16 %v1034, %v1030
  %v1059 = vpack.c.b16 %v1035, %v1031
  %v1060 = vpack.c.b16 %v1040, %v1036
  %v1061 = vpack.c.b16 %v1041, %v1037
  %v1062 = vpack.c.b16 %v1042, %v1038
  %v1063 = vpack.c.b16 %v1043, %v1039
  %v1064 = vpack.c.b16 %v1048, %v1044
  %v1065 = vpack.c.b16 %v1049, %v1045
  %v1066 = vpack.c.b16 %v1050, %v1046
  %v1067 = vpack.c.b16 %v1051, %v1047
  %v1085 = vsel %vm55, %v965, 0
  %1087 = vmatprep.subr.bf16.mxu0 %v1053
  %1088 = vmatpush1.bf16.msra.mxu0 %v1052
  %1089 = vmatprep.subr.bf16.mxu0 %v1057
  %1090 = vmatpush1.bf16.msra.mxu0 %v1056
  %1091 = vmatprep.subr.bf16.mxu0 %v1061
  %1092 = vmatpush1.bf16.msra.mxu0 %v1060
  %1093 = vmatprep.subr.bf16.mxu0 %v1065
  %1094 = vmatpush1.bf16.msra.mxu0 %v1064
  %1095 = vmatprep.subr.bf16.mxu0 0
  %1096 = vmatpush1.bf16.msra.mxu0 0
  %1097 = vmatprep.subr.bf16.mxu0 0
  %1098 = vmatpush1.bf16.msra.mxu0 0
  %1099 = vmatprep.subr.bf16.mxu0 0
  %1100 = vmatpush1.bf16.msra.mxu0 0
  %1101 = vmatprep.subr.bf16.mxu0 0
  %1102 = vmatpush1.bf16.msra.mxu0 0
  %1103 = vmatprep.subr.bf16.mxu0 0
  %1104 = vmatpush1.bf16.msra.mxu0 0
  %1105 = vmatprep.subr.bf16.mxu0 0
  %1106 = vmatpush1.bf16.msra.mxu0 0
  %1107 = vmatprep.subr.bf16.mxu0 0
  %1108 = vmatpush1.bf16.msra.mxu0 0
  %1109 = vmatprep.subr.bf16.mxu0 0
  %1110 = vmatpush1.bf16.msra.mxu0 0
  %1111 = vmatprep.subr.bf16.mxu0 0
  %1112 = vmatpush1.bf16.msra.mxu0 0
  %1113 = vmatprep.subr.bf16.mxu0 0
  %1114 = vmatpush1.bf16.msra.mxu0 0
  %1115 = vmatprep.subr.bf16.mxu0 0
  %1116 = vmatpush1.bf16.msra.mxu0 0
  %1117 = vmatprep.subr.bf16.mxu0 0
  %1118 = vmatpush1.bf16.msra.mxu0 0
  %1119 = vmatprep.mubr.bf16.mxu0 0
  %1120 = vmatmul.mubr.bf16.gmra.mrb[0].mxu0 %v1085
  %v1121 = vpop.f32.mrb[0].mxu0
  %v1122 = vadd.f32 %v991, %v1121
  %v1123 = vpop.f32.mrb[0].mxu0
  %v1124 = vadd.f32 %v995, %v1123
  %v1125 = vpop.f32.mrb[0].mxu0
  %v1126 = vpop.f32.mrb[0].mxu0
  %1127 = vdwg.mxu0
  %1128 = vmatprep.subr.bf16.mxu0 %v1055
  %1129 = vmatpush1.bf16.msra.mxu0 %v1054
  %1130 = vmatprep.subr.bf16.mxu0 %v1059
  %1131 = vmatpush1.bf16.msra.mxu0 %v1058
  %1132 = vmatprep.subr.bf16.mxu0 %v1063
  %1133 = vmatpush1.bf16.msra.mxu0 %v1062
  %1134 = vmatprep.subr.bf16.mxu0 %v1067
  %1135 = vmatpush1.bf16.msra.mxu0 %v1066
  %1136 = vmatprep.subr.bf16.mxu0 0
  %1137 = vmatpush1.bf16.msra.mxu0 0
  %1138 = vmatprep.subr.bf16.mxu0 0
  %1139 = vmatpush1.bf16.msra.mxu0 0
  %1140 = vmatprep.subr.bf16.mxu0 0
  %1141 = vmatpush1.bf16.msra.mxu0 0
  %1142 = vmatprep.subr.bf16.mxu0 0
  %1143 = vmatpush1.bf16.msra.mxu0 0
  %1144 = vmatprep.subr.bf16.mxu0 0
  %1145 = vmatpush1.bf16.msra.mxu0 0
  %1146 = vmatprep.subr.bf16.mxu0 0
  %1147 = vmatpush1.bf16.msra.mxu0 0
  %1148 = vmatprep.subr.bf16.mxu0 0
  %1149 = vmatpush1.bf16.msra.mxu0 0
  %1150 = vmatprep.subr.bf16.mxu0 0
  %1151 = vmatpush1.bf16.msra.mxu0 0
  %1152 = vmatprep.subr.bf16.mxu0 0
  %1153 = vmatpush1.bf16.msra.mxu0 0
  %1154 = vmatprep.subr.bf16.mxu0 0
  %1155 = vmatpush1.bf16.msra.mxu0 0
  %1156 = vmatprep.subr.bf16.mxu0 0
  %1157 = vmatpush1.bf16.msra.mxu0 0
  %1158 = vmatprep.subr.bf16.mxu0 0
  %1159 = vmatpush1.bf16.msra.mxu0 0
  %1160 = vmatprep.mubr.bf16.mxu0 0
  %1161 = vmatmul.mubr.bf16.gmra.mrb[0].mxu0 %v1085
  %v1162 = vpop.f32.mrb[0].mxu0
  %v1163 = vadd.f32 %v999, %v1162
  %v1164 = vpop.f32.mrb[0].mxu0
  %v1165 = vadd.f32 %v1003, %v1164
  %v1166 = vpop.f32.mrb[0].mxu0
  %v1167 = vpop.f32.mrb[0].mxu0
  %1168 = vdwg.mxu0
  %v1169 = vmax.f32 %v1122, 0.0
  %v1170 = vmax.f32 %v1124, 0.0
  %v1171 = vmax.f32 %v1163, 0.0
  %v1172 = vmax.f32 %v1165, 0.0
  %v1173 = vpack.c.bf16 %v1169, %v1169
  %v1174 = vpack.c.bf16 %v1170, %v1170
  %v1175 = vpack.c.bf16 %v1171, %v1171
  %v1176 = vpack.c.bf16 %v1172, %v1172
  %v1177 = vld [vmem:[%s1 + $0x8e0] sm:$0xf]
  %v1178 = vld [vmem:[%s1 + $0x8f0] sm:$0xf]
  %v1179 = vld [vmem:[%s1 + $0x900] sm:$0xf]
  %v1180 = vld [vmem:[%s1 + $0x910] sm:$0xf]
  %v1181 = vld [vmem:[%s1 + $0x920] sm:$0xf]
  %v1182 = vld [vmem:[%s1 + $0x930] sm:$0xf]
  %v1183 = vld [vmem:[%s1 + $0x940] sm:$0xf]
  %v1184 = vld [vmem:[%s1 + $0x950] sm:$0xf]
  %v1185 = vld [vmem:[%s1 + $0x960] sm:$0xf]
  %v1186 = vld [vmem:[%s1 + $0x970] sm:$0xf]
  %v1187 = vld [vmem:[%s1 + $0x980] sm:$0xf]
  %v1188 = vld [vmem:[%s1 + $0x990] sm:$0xf]
  %v1189 = vld [vmem:[%s1 + $0x9a0] sm:$0xf]
  %v1190 = vld [vmem:[%s1 + $0x9b0] sm:$0xf]
  %v1191 = vld [vmem:[%s1 + $0x9c0] sm:$0xf]
  %v1192 = vld [vmem:[%s1 + $0x9d0] sm:$0xf]
  %v1193 = vld [vmem:[%s1 + $0x9e0] sm:$0xf]
  %v1194 = vld [vmem:[%s1 + $0x9f0] sm:$0xf]
  %v1195 = vld [vmem:[%s1 + $0xa00] sm:$0xf]
  %v1196 = vld [vmem:[%s1 + $0xa10] sm:$0xf]
  %v1197 = vld [vmem:[%s1 + $0xa20] sm:$0xf]
  %v1198 = vld [vmem:[%s1 + $0xa30] sm:$0xf]
  %v1199 = vld [vmem:[%s1 + $0xa40] sm:$0xf]
  %v1200 = vld [vmem:[%s1 + $0xa50] sm:$0xf]
  %v1201 = vld [vmem:[%s1 + $0xa60] sm:$0xf]
  %v1202 = vld [vmem:[%s1 + $0xa70] sm:$0xf]
  %v1203 = vld [vmem:[%s1 + $0xa80] sm:$0xf]
  %v1204 = vld [vmem:[%s1 + $0xa90] sm:$0xf]
  %v1205 = vld [vmem:[%s1 + $0xaa0] sm:$0xf]
  %v1206 = vld [vmem:[%s1 + $0xab0] sm:$0xf]
  %v1207 = vld [vmem:[%s1 + $0xac0] sm:$0xf]
  %v1208 = vld [vmem:[%s1 + $0xad0] sm:$0xf]
  %v1209 = vld [vmem:[%s1 + $0xae0] sm:$0xf]
  %v1210 = vld [vmem:[%s1 + $0xaf0] sm:$0xf]
  %v1211 = vld [vmem:[%s1 + $0xb00] sm:$0xf]
  %v1212 = vld [vmem:[%s1 + $0xb10] sm:$0xf]
  %v1213 = vld [vmem:[%s1 + $0xb20] sm:$0xf]
  %v1214 = vld [vmem:[%s1 + $0xb30] sm:$0xf]
  %v1215 = vld [vmem:[%s1 + $0xb40] sm:$0xf]
  %v1216 = vld [vmem:[%s1 + $0xb50] sm:$0xf]
  %v1217 = vld [vmem:[%s1 + $0xb60] sm:$0xf]
  %v1218 = vld [vmem:[%s1 + $0xb70] sm:$0xf]
  %v1219 = vld [vmem:[%s1 + $0xb80] sm:$0xf]
  %v1220 = vld [vmem:[%s1 + $0xb90] sm:$0xf]
  %v1221 = vld [vmem:[%s1 + $0xba0] sm:$0xf]
  %v1222 = vld [vmem:[%s1 + $0xbb0] sm:$0xf]
  %v1223 = vld [vmem:[%s1 + $0xbc0] sm:$0xf]
  %v1224 = vld [vmem:[%s1 + $0xbd0] sm:$0xf]
  %v1225 = vld [vmem:[%s1 + $0xbe0] sm:$0xf]
  %v1226 = vld [vmem:[%s1 + $0xbf0] sm:$0xf]
  %v1227 = vld [vmem:[%s1 + $0xc00] sm:$0xf]
  %v1228 = vld [vmem:[%s1 + $0xc10] sm:$0xf]
  %v1229 = vld [vmem:[%s1 + $0xc20] sm:$0xf]
  %v1230 = vld [vmem:[%s1 + $0xc30] sm:$0xf]
  %v1231 = vld [vmem:[%s1 + $0xc40] sm:$0xf]
  %v1232 = vld [vmem:[%s1 + $0xc50] sm:$0xf]
  %v1233 = vld [vmem:[%s1 + $0xc60] sm:$0xf]
  %v1234 = vld [vmem:[%s1 + $0xc70] sm:$0xf]
  %v1235 = vld [vmem:[%s1 + $0xc80] sm:$0xf]
  %v1236 = vld [vmem:[%s1 + $0xc90] sm:$0xf]
  %v1237 = vld [vmem:[%s1 + $0xca0] sm:$0xf]
  %v1238 = vld [vmem:[%s1 + $0xcb0] sm:$0xf]
  %v1239 = vld [vmem:[%s1 + $0xcc0] sm:$0xf]
  %v1240 = vld [vmem:[%s1 + $0xcd0] sm:$0xf]
  %v1305 = vunpack.c.l.b16 %v1177
  %v1306 = vunpack.c.l.b16 %v1178
  %v1307 = vunpack.c.l.b16 %v1179
  %v1308 = vunpack.c.l.b16 %v1180
  %v1309 = vunpack.c.l.b16 %v1181
  %v1310 = vunpack.c.l.b16 %v1182
  %v1311 = vunpack.c.l.b16 %v1183
  %v1312 = vunpack.c.l.b16 %v1184
  %v1313 = vunpack.c.l.b16 %v1185
  %v1314 = vunpack.c.l.b16 %v1186
  %v1315 = vunpack.c.l.b16 %v1187
  %v1316 = vunpack.c.l.b16 %v1188
  %v1317 = vunpack.c.l.b16 %v1189
  %v1318 = vunpack.c.l.b16 %v1190
  %v1319 = vunpack.c.l.b16 %v1191
  %v1320 = vunpack.c.l.b16 %v1192
  %v1321 = vunpack.c.l.b16 %v1193
  %v1322 = vunpack.c.l.b16 %v1194
  %v1323 = vunpack.c.l.b16 %v1195
  %v1324 = vunpack.c.l.b16 %v1196
  %v1325 = vunpack.c.l.b16 %v1197
  %v1326 = vunpack.c.l.b16 %v1198
  %v1327 = vunpack.c.l.b16 %v1199
  %v1328 = vunpack.c.l.b16 %v1200
  %v1329 = vunpack.c.l.b16 %v1201
  %v1330 = vunpack.c.l.b16 %v1202
  %v1331 = vunpack.c.l.b16 %v1203
  %v1332 = vunpack.c.l.b16 %v1204
  %v1333 = vunpack.c.l.b16 %v1205
  %v1334 = vunpack.c.l.b16 %v1206
  %v1335 = vunpack.c.l.b16 %v1207
  %v1336 = vunpack.c.l.b16 %v1208
  %v1337 = vunpack.c.l.b16 %v1209
  %v1338 = vunpack.c.l.b16 %v1210
  %v1339 = vunpack.c.l.b16 %v1211
  %v1340 = vunpack.c.l.b16 %v1212
  %v1341 = vunpack.c.l.b16 %v1213
  %v1342 = vunpack.c.l.b16 %v1214
  %v1343 = vunpack.c.l.b16 %v1215
  %v1344 = vunpack.c.l.b16 %v1216
  %v1345 = vunpack.c.l.b16 %v1217
  %v1346 = vunpack.c.l.b16 %v1218
  %v1347 = vunpack.c.l.b16 %v1219
  %v1348 = vunpack.c.l.b16 %v1220
  %v1349 = vunpack.c.l.b16 %v1221
  %v1350 = vunpack.c.l.b16 %v1222
  %v1351 = vunpack.c.l.b16 %v1223
  %v1352 = vunpack.c.l.b16 %v1224
  %v1353 = vunpack.c.l.b16 %v1225
  %v1354 = vunpack.c.l.b16 %v1226
  %v1355 = vunpack.c.l.b16 %v1227
  %v1356 = vunpack.c.l.b16 %v1228
  %v1357 = vunpack.c.l.b16 %v1229
  %v1358 = vunpack.c.l.b16 %v1230
  %v1359 = vunpack.c.l.b16 %v1231
  %v1360 = vunpack.c.l.b16 %v1232
  %v1361 = vunpack.c.l.b16 %v1233
  %v1362 = vunpack.c.l.b16 %v1234
  %v1363 = vunpack.c.l.b16 %v1235
  %v1364 = vunpack.c.l.b16 %v1236
  %v1365 = vunpack.c.l.b16 %v1237
  %v1366 = vunpack.c.l.b16 %v1238
  %v1367 = vunpack.c.l.b16 %v1239
  %v1368 = vunpack.c.l.b16 %v1240
  %v1369 = vpack.c.b16 %v1306, %v1305
  %v1370 = vpack.c.b16 %v1308, %v1307
  %v1371 = vpack.c.b16 %v1310, %v1309
  %v1372 = vpack.c.b16 %v1312, %v1311
  %v1373 = vpack.c.b16 %v1314, %v1313
  %v1374 = vpack.c.b16 %v1316, %v1315
  %v1375 = vpack.c.b16 %v1318, %v1317
  %v1376 = vpack.c.b16 %v1320, %v1319
  %v1377 = vpack.c.b16 %v1322, %v1321
  %v1378 = vpack.c.b16 %v1324, %v1323
  %v1379 = vpack.c.b16 %v1326, %v1325
  %v1380 = vpack.c.b16 %v1328, %v1327
  %v1381 = vpack.c.b16 %v1330, %v1329
  %v1382 = vpack.c.b16 %v1332, %v1331
  %v1383 = vpack.c.b16 %v1334, %v1333
  %v1384 = vpack.c.b16 %v1336, %v1335
  %v1385 = vpack.c.b16 %v1338, %v1337
  %v1386 = vpack.c.b16 %v1340, %v1339
  %v1387 = vpack.c.b16 %v1342, %v1341
  %v1388 = vpack.c.b16 %v1344, %v1343
  %v1389 = vpack.c.b16 %v1346, %v1345
  %v1390 = vpack.c.b16 %v1348, %v1347
  %v1391 = vpack.c.b16 %v1350, %v1349
  %v1392 = vpack.c.b16 %v1352, %v1351
  %v1393 = vpack.c.b16 %v1354, %v1353
  %v1394 = vpack.c.b16 %v1356, %v1355
  %v1395 = vpack.c.b16 %v1358, %v1357
  %v1396 = vpack.c.b16 %v1360, %v1359
  %v1397 = vpack.c.b16 %v1362, %v1361
  %v1398 = vpack.c.b16 %v1364, %v1363
  %v1399 = vpack.c.b16 %v1366, %v1365
  %v1400 = vpack.c.b16 %v1368, %v1367
  %1433 = vmatprep.subr.bf16.mxu0 0
  %1434 = vmatpush1.bf16.msra.mxu0 %v1369
  %1435 = vmatprep.subr.bf16.mxu0 0
  %1436 = vmatpush1.bf16.msra.mxu0 %v1370
  %1437 = vmatprep.subr.bf16.mxu0 0
  %1438 = vmatpush1.bf16.msra.mxu0 %v1371
  %1439 = vmatprep.subr.bf16.mxu0 0
  %1440 = vmatpush1.bf16.msra.mxu0 %v1372
  %1441 = vmatprep.subr.bf16.mxu0 0
  %1442 = vmatpush1.bf16.msra.mxu0 %v1373
  %1443 = vmatprep.subr.bf16.mxu0 0
  %1444 = vmatpush1.bf16.msra.mxu0 %v1374
  %1445 = vmatprep.subr.bf16.mxu0 0
  %1446 = vmatpush1.bf16.msra.mxu0 %v1375
  %1447 = vmatprep.subr.bf16.mxu0 0
  %1448 = vmatpush1.bf16.msra.mxu0 %v1376
  %1449 = vmatprep.subr.bf16.mxu0 0
  %1450 = vmatpush1.bf16.msra.mxu0 %v1377
  %1451 = vmatprep.subr.bf16.mxu0 0
  %1452 = vmatpush1.bf16.msra.mxu0 %v1378
  %1453 = vmatprep.subr.bf16.mxu0 0
  %1454 = vmatpush1.bf16.msra.mxu0 %v1379
  %1455 = vmatprep.subr.bf16.mxu0 0
  %1456 = vmatpush1.bf16.msra.mxu0 %v1380
  %1457 = vmatprep.subr.bf16.mxu0 0
  %1458 = vmatpush1.bf16.msra.mxu0 %v1381
  %1459 = vmatprep.subr.bf16.mxu0 0
  %1460 = vmatpush1.bf16.msra.mxu0 %v1382
  %1461 = vmatprep.subr.bf16.mxu0 0
  %1462 = vmatpush1.bf16.msra.mxu0 %v1383
  %1463 = vmatprep.subr.bf16.mxu0 0
  %1464 = vmatpush1.bf16.msra.mxu0 %v1384
  %1465 = vmatprep.mubr.bf16.mxu0 %v1174
  %1466 = vmatmul.mubr.bf16.gmra.mrb[0].mxu0 %v1173
  %v1467 = vpop.f32.mrb[0].mxu0
  %v1468 = vadd.f32 0.0, %v1467
  %v1469 = vpop.f32.mrb[0].mxu0
  %v1470 = vpop.f32.mrb[0].mxu0
  %v1471 = vpop.f32.mrb[0].mxu0
  %1472 = vdwg.mxu0
  %1473 = vmatprep.subr.bf16.mxu0 0
  %1474 = vmatpush1.bf16.msra.mxu0 %v1385
  %1475 = vmatprep.subr.bf16.mxu0 0
  %1476 = vmatpush1.bf16.msra.mxu0 %v1386
  %1477 = vmatprep.subr.bf16.mxu0 0
  %1478 = vmatpush1.bf16.msra.mxu0 %v1387
  %1479 = vmatprep.subr.bf16.mxu0 0
  %1480 = vmatpush1.bf16.msra.mxu0 %v1388
  %1481 = vmatprep.subr.bf16.mxu0 0
  %1482 = vmatpush1.bf16.msra.mxu0 %v1389
  %1483 = vmatprep.subr.bf16.mxu0 0
  %1484 = vmatpush1.bf16.msra.mxu0 %v1390
  %1485 = vmatprep.subr.bf16.mxu0 0
  %1486 = vmatpush1.bf16.msra.mxu0 %v1391
  %1487 = vmatprep.subr.bf16.mxu0 0
  %1488 = vmatpush1.bf16.msra.mxu0 %v1392
  %1489 = vmatprep.subr.bf16.mxu0 0
  %1490 = vmatpush1.bf16.msra.mxu0 %v1393
  %1491 = vmatprep.subr.bf16.mxu0 0
  %1492 = vmatpush1.bf16.msra.mxu0 %v1394
  %1493 = vmatprep.subr.bf16.mxu0 0
  %1494 = vmatpush1.bf16.msra.mxu0 %v1395
  %1495 = vmatprep.subr.bf16.mxu0 0
  %1496 = vmatpush1.bf16.msra.mxu0 %v1396
  %1497 = vmatprep.subr.bf16.mxu0 0
  %1498 = vmatpush1.bf16.msra.mxu0 %v1397
  %1499 = vmatprep.subr.bf16.mxu0 0
  %1500 = vmatpush1.bf16.msra.mxu0 %v1398
  %1501 = vmatprep.subr.bf16.mxu0 0
  %1502 = vmatpush1.bf16.msra.mxu0 %v1399
  %1503 = vmatprep.subr.bf16.mxu0 0
  %1504 = vmatpush1.bf16.msra.mxu0 %v1400
  %1505 = vmatprep.mubr.bf16.mxu0 %v1176
  %1506 = vmatmul.mubr.bf16.gmra.mrb[0].mxu0 %v1175
  %v1507 = vpop.f32.mrb[0].mxu0
  %v1508 = vadd.f32 %v1468, %v1507
  %v1509 = vpop.f32.mrb[0].mxu0
  %v1510 = vpop.f32.mrb[0].mxu0
  %v1511 = vpop.f32.mrb[0].mxu0
  %1512 = vdwg.mxu0
  %v1513 = vadd.f32 %v964, %v1508
  %v1514 = vld [vmem:[%s1 + $0xce0] sm:$0x1]
  %v1515 = vunpack.c.l.bf16 %v1514
  %v1516 = vlaneseq
  %v1517 = vshrl.u32 %v1516, 7
  %v1518 = vsub.s32 0, %v1517
  %v1519 = vrot.slane %v1515, %v1518
  %v1520 = vadd.f32 %v1513, %v1519
  %v1521 = vpack.c.bf16 %v1520, %v1520
  %v1522 = vld [vmem:[%s1 + $0xd00] sm:$0xf]
  %v1523 = vld [vmem:[%s1 + $0xd10] sm:$0xf]
  %v1524 = vld [vmem:[%s1 + $0xd20] sm:$0xf]
  %v1525 = vld [vmem:[%s1 + $0xd30] sm:$0xf]
  %v1526 = vld [vmem:[%s1 + $0xd40] sm:$0xf]
  %v1527 = vld [vmem:[%s1 + $0xd50] sm:$0xf]
  %v1528 = vld [vmem:[%s1 + $0xd60] sm:$0xf]
  %v1529 = vld [vmem:[%s1 + $0xd70] sm:$0xf]
  %v1530 = vld [vmem:[%s1 + $0xd80] sm:$0x1]
  %v1531 = vunpack.c.l.bf16 %v1530
  %v1532 = vlaneseq
  %v1533 = vshrl.u32 %v1532, 7
  %v1534 = vsub.s32 0, %v1533
  %v1535 = vrot.slane %v1531, %v1534
  %v1544 = vunpack.c.l.b16 %v1522
  %v1545 = vunpack.c.l.b16 %v1523
  %v1546 = vunpack.c.l.b16 %v1524
  %v1547 = vunpack.c.l.b16 %v1525
  %v1548 = vunpack.c.l.b16 %v1526
  %v1549 = vunpack.c.l.b16 %v1527
  %v1550 = vunpack.c.l.b16 %v1528
  %v1551 = vunpack.c.l.b16 %v1529
  %v1552 = vpack.c.b16 %v1545, %v1544
  %v1553 = vpack.c.b16 %v1547, %v1546
  %v1554 = vpack.c.b16 %v1549, %v1548
  %v1555 = vpack.c.b16 %v1551, %v1550
  %v1561 = vsel %vm55, %v1521, 0
  %1563 = vmatprep.subr.bf16.mxu0 0
  %1564 = vmatpush1.bf16.msra.mxu0 %v1552
  %1565 = vmatprep.subr.bf16.mxu0 0
  %1566 = vmatpush1.bf16.msra.mxu0 %v1553
  %1567 = vmatprep.subr.bf16.mxu0 0
  %1568 = vmatpush1.bf16.msra.mxu0 %v1554
  %1569 = vmatprep.subr.bf16.mxu0 0
  %1570 = vmatpush1.bf16.msra.mxu0 %v1555
  %1571 = vmatprep.subr.bf16.mxu0 0
  %1572 = vmatpush1.bf16.msra.mxu0 0
  %1573 = vmatprep.subr.bf16.mxu0 0
  %1574 = vmatpush1.bf16.msra.mxu0 0
  %1575 = vmatprep.subr.bf16.mxu0 0
  %1576 = vmatpush1.bf16.msra.mxu0 0
  %1577 = vmatprep.subr.bf16.mxu0 0
  %1578 = vmatpush1.bf16.msra.mxu0 0
  %1579 = vmatprep.subr.bf16.mxu0 0
  %1580 = vmatpush1.bf16.msra.mxu0 0
  %1581 = vmatprep.subr.bf16.mxu0 0
  %1582 = vmatpush1.bf16.msra.mxu0 0
  %1583 = vmatprep.subr.bf16.mxu0 0
  %1584 = vmatpush1.bf16.msra.mxu0 0
  %1585 = vmatprep.subr.bf16.mxu0 0
  %1586 = vmatpush1.bf16.msra.mxu0 0
  %1587 = vmatprep.subr.bf16.mxu0 0
  %1588 = vmatpush1.bf16.msra.mxu0 0
  %1589 = vmatprep.subr.bf16.mxu0 0
  %1590 = vmatpush1.bf16.msra.mxu0 0
  %1591 = vmatprep.subr.bf16.mxu0 0
  %1592 = vmatpush1.bf16.msra.mxu0 0
  %1593 = vmatprep.subr.bf16.mxu0 0
  %1594 = vmatpush1.bf16.msra.mxu0 0
  %1595 = vmatprep.mubr.bf16.mxu0 0
  %1596 = vmatmul.mubr.bf16.gmra.mrb[0].mxu0 %v1561
  %v1597 = vpop.f32.mrb[0].mxu0
  %v1598 = vadd.f32 %v1535, %v1597
  %v1599 = vpop.f32.mrb[0].mxu0
  %v1600 = vpop.f32.mrb[0].mxu0
  %v1601 = vpop.f32.mrb[0].mxu0
  %1602 = vdwg.mxu0
  %v1603 = vld [vmem:[%s1 + $0xda0] sm:$0x1]
  %v1604 = vunpack.c.l.bf16 %v1603
  %s1606 = vtos %v1604
  %v1607 = vstv %s1606
  %v1609 = vmul.f32 %v1607, %v1598
  %v1610 = vld [vmem:[%s2] sm:$0xff]
  %v1611 = vld [vmem:[%s2 + $0x8] sm:$0xff]
  %v1612 = vld [vmem:[%s2 + $0x10] sm:$0xff]
  %v1613 = vld [vmem:[%s2 + $0x18] sm:$0xff]
  %v1614 = vld [vmem:[%s2 + $0x20] sm:$0xff]
  %1616 = vrot.lane.b32.xlu0 %v1598, 8
  %v1617 = vpop.permute.xlu0 %1616
  %1619 = vrot.lane.b32.xlu0 %v1598, 16
  %v1620 = vpop.permute.xlu0 %1619
  %1622 = vrot.lane.b32.xlu0 %v1598, 24
  %v1623 = vpop.permute.xlu0 %1622
  %vm1625 = vcmask 64512
  %v1626 = vsel %vm1625, %v1598, %v1617
  %vm1627 = vcmask 130048
  %v1628 = vsel %vm1627, %v1626, %v1620
  %vm1629 = vcmask 195584
  %v1630 = vsel %vm1629, %v1628, %v1623
  %v1631 = vmul.f32 %v1610, %v1630
  %v1632 = vadd.f32 %v1609, %v1631
  %1634 = vrot.lane.b32.xlu0 %v15, 113
  %v1635 = vpop.permute.xlu0 %1634
  %1637 = vrot.lane.b32.xlu0 %v1598, 1
  %v1638 = vpop.permute.xlu0 %1637
  %vm1640 = vcmask 7168
  %v1641 = vsel %vm1640, %v1635, %v1638
  %1643 = vrot.lane.b32.xlu0 %v1641, 8
  %v1644 = vpop.permute.xlu0 %1643
  %1646 = vrot.lane.b32.xlu0 %v1641, 16
  %v1647 = vpop.permute.xlu0 %1646
  %1649 = vrot.lane.b32.xlu0 %v1641, 24
  %v1650 = vpop.permute.xlu0 %1649
  %v1652 = vsel %vm1625, %v1641, %v1644
  %v1653 = vsel %vm1627, %v1652, %v1647
  %v1654 = vsel %vm1629, %v1653, %v1650
  %1656 = vrot.lane.b32.xlu0 %v1654, 32
  %v1657 = vpop.permute.xlu0 %1656
  %v1659 = vmul.f32 %v1610, %v1657
  %1661 = vrot.lane.b32.xlu0 %v1659, 96
  %v1662 = vpop.permute.xlu0 %1661
  %v1664 = vadd.f32 %v1632, %v1662
  %1665 = vrot.lane.b32.xlu0 %v15, 114
  %v1666 = vpop.permute.xlu0 %1665
  %1668 = vrot.lane.b32.xlu0 %v1598, 2
  %v1669 = vpop.permute.xlu0 %1668
  %vm1671 = vcmask 15360
  %v1672 = vsel %vm1671, %v1666, %v1669
  %1674 = vrot.lane.b32.xlu0 %v1672, 8
  %v1675 = vpop.permute.xlu0 %1674
  %1677 = vrot.lane.b32.xlu0 %v1672, 16
  %v1678 = vpop.permute.xlu0 %1677
  %1680 = vrot.lane.b32.xlu0 %v1672, 24
  %v1681 = vpop.permute.xlu0 %1680
  %v1683 = vsel %vm1625, %v1672, %v1675
  %v1684 = vsel %vm1627, %v1683, %v1678
  %v1685 = vsel %vm1629, %v1684, %v1681
  %1687 = vrot.lane.b32.xlu0 %v1685, 64
  %v1688 = vpop.permute.xlu0 %1687
  %v1690 = vmul.f32 %v1610, %v1688
  %1692 = vrot.lane.b32.xlu0 %v1690, 64
  %v1693 = vpop.permute.xlu0 %1692
  %v1695 = vadd.f32 %v1664, %v1693
  %1696 = vrot.lane.b32.xlu0 %v15, 115
  %v1697 = vpop.permute.xlu0 %1696
  %1699 = vrot.lane.b32.xlu0 %v1598, 3
  %v1700 = vpop.permute.xlu0 %1699
  %vm1702 = vcmask 23552
  %v1703 = vsel %vm1702, %v1697, %v1700
  %1705 = vrot.lane.b32.xlu0 %v1703, 8
  %v1706 = vpop.permute.xlu0 %1705
  %1708 = vrot.lane.b32.xlu0 %v1703, 16
  %v1709 = vpop.permute.xlu0 %1708
  %1711 = vrot.lane.b32.xlu0 %v1703, 24
  %v1712 = vpop.permute.xlu0 %1711
  %v1714 = vsel %vm1625, %v1703, %v1706
  %v1715 = vsel %vm1627, %v1714, %v1709
  %v1716 = vsel %vm1629, %v1715, %v1712
  %1718 = vrot.lane.b32.xlu0 %v1716, 96
  %v1719 = vpop.permute.xlu0 %1718
  %v1721 = vmul.f32 %v1610, %v1719
  %1723 = vrot.lane.b32.xlu0 %v1721, 32
  %v1724 = vpop.permute.xlu0 %1723
  %v1726 = vadd.f32 %v1695, %v1724
  %1727 = vrot.lane.b32.xlu0 %v15, 116
  %v1728 = vpop.permute.xlu0 %1727
  %1730 = vrot.lane.b32.xlu0 %v1598, 4
  %v1731 = vpop.permute.xlu0 %1730
  %vm1733 = vcmask 31744
  %v1734 = vsel %vm1733, %v1728, %v1731
  %1736 = vrot.lane.b32.xlu0 %v1734, 8
  %v1737 = vpop.permute.xlu0 %1736
  %1739 = vrot.lane.b32.xlu0 %v1734, 16
  %v1740 = vpop.permute.xlu0 %1739
  %1742 = vrot.lane.b32.xlu0 %v1734, 24
  %v1743 = vpop.permute.xlu0 %1742
  %v1745 = vsel %vm1625, %v1734, %v1737
  %v1746 = vsel %vm1627, %v1745, %v1740
  %v1747 = vsel %vm1629, %v1746, %v1743
  %v1748 = vmul.f32 %v1611, %v1747
  %v1749 = vadd.f32 %v1726, %v1748
  %1750 = vrot.lane.b32.xlu0 %v1598, 120
  %v1751 = vpop.permute.xlu0 %1750
  %v1753 = vsel %vm1625, %v1751, %v1598
  %v1754 = vsel %vm1627, %v1753, %v1617
  %v1755 = vsel %vm1629, %v1754, %v1620
  %1757 = vrot.lane.b32.xlu0 %v1755, 32
  %v1758 = vpop.permute.xlu0 %1757
  %v1760 = vmul.f32 %v1611, %v1758
  %1762 = vrot.lane.b32.xlu0 %v1760, 96
  %v1763 = vpop.permute.xlu0 %1762
  %v1765 = vadd.f32 %v1749, %v1763
  %1766 = vrot.lane.b32.xlu0 %v15, 97
  %v1767 = vpop.permute.xlu0 %1766
  %1769 = vrot.lane.b32.xlu0 %v1598, 121
  %v1770 = vpop.permute.xlu0 %1769
  %v1772 = vsel %vm1640, %v1767, %v1770
  %1774 = vrot.lane.b32.xlu0 %v1772, 8
  %v1775 = vpop.permute.xlu0 %1774
  %1777 = vrot.lane.b32.xlu0 %v1772, 16
  %v1778 = vpop.permute.xlu0 %1777
  %1780 = vrot.lane.b32.xlu0 %v1772, 24
  %v1781 = vpop.permute.xlu0 %1780
  %v1783 = vsel %vm1625, %v1772, %v1775
  %v1784 = vsel %vm1627, %v1783, %v1778
  %v1785 = vsel %vm1629, %v1784, %v1781
  %1787 = vrot.lane.b32.xlu0 %v1785, 64
  %v1788 = vpop.permute.xlu0 %1787
  %v1790 = vmul.f32 %v1611, %v1788
  %1792 = vrot.lane.b32.xlu0 %v1790, 64
  %v1793 = vpop.permute.xlu0 %1792
  %v1795 = vadd.f32 %v1765, %v1793
  %1796 = vrot.lane.b32.xlu0 %v15, 98
  %v1797 = vpop.permute.xlu0 %1796
  %1799 = vrot.lane.b32.xlu0 %v1598, 122
  %v1800 = vpop.permute.xlu0 %1799
  %v1802 = vsel %vm1671, %v1797, %v1800
  %1804 = vrot.lane.b32.xlu0 %v1802, 8
  %v1805 = vpop.permute.xlu0 %1804
  %1807 = vrot.lane.b32.xlu0 %v1802, 16
  %v1808 = vpop.permute.xlu0 %1807
  %1810 = vrot.lane.b32.xlu0 %v1802, 24
  %v1811 = vpop.permute.xlu0 %1810
  %v1813 = vsel %vm1625, %v1802, %v1805
  %v1814 = vsel %vm1627, %v1813, %v1808
  %v1815 = vsel %vm1629, %v1814, %v1811
  %1817 = vrot.lane.b32.xlu0 %v1815, 96
  %v1818 = vpop.permute.xlu0 %1817
  %v1820 = vmul.f32 %v1611, %v1818
  %1822 = vrot.lane.b32.xlu0 %v1820, 32
  %v1823 = vpop.permute.xlu0 %1822
  %v1825 = vadd.f32 %v1795, %v1823
  %1826 = vrot.lane.b32.xlu0 %v15, 99
  %v1827 = vpop.permute.xlu0 %1826
  %1829 = vrot.lane.b32.xlu0 %v1598, 123
  %v1830 = vpop.permute.xlu0 %1829
  %v1832 = vsel %vm1702, %v1827, %v1830
  %1834 = vrot.lane.b32.xlu0 %v1832, 8
  %v1835 = vpop.permute.xlu0 %1834
  %1837 = vrot.lane.b32.xlu0 %v1832, 16
  %v1838 = vpop.permute.xlu0 %1837
  %1840 = vrot.lane.b32.xlu0 %v1832, 24
  %v1841 = vpop.permute.xlu0 %1840
  %v1843 = vsel %vm1625, %v1832, %v1835
  %v1844 = vsel %vm1627, %v1843, %v1838
  %v1845 = vsel %vm1629, %v1844, %v1841
  %v1846 = vmul.f32 %v1612, %v1845
  %v1847 = vadd.f32 %v1825, %v1846
  %1848 = vrot.lane.b32.xlu0 %v15, 100
  %v1849 = vpop.permute.xlu0 %1848
  %1851 = vrot.lane.b32.xlu0 %v1598, 124
  %v1852 = vpop.permute.xlu0 %1851
  %v1854 = vsel %vm1733, %v1849, %v1852
  %1856 = vrot.lane.b32.xlu0 %v1854, 8
  %v1857 = vpop.permute.xlu0 %1856
  %1859 = vrot.lane.b32.xlu0 %v1854, 16
  %v1860 = vpop.permute.xlu0 %1859
  %1862 = vrot.lane.b32.xlu0 %v1854, 24
  %v1863 = vpop.permute.xlu0 %1862
  %v1865 = vsel %vm1625, %v1854, %v1857
  %v1866 = vsel %vm1627, %v1865, %v1860
  %v1867 = vsel %vm1629, %v1866, %v1863
  %1869 = vrot.lane.b32.xlu0 %v1867, 32
  %v1870 = vpop.permute.xlu0 %1869
  %v1872 = vmul.f32 %v1612, %v1870
  %1874 = vrot.lane.b32.xlu0 %v1872, 96
  %v1875 = vpop.permute.xlu0 %1874
  %v1877 = vadd.f32 %v1847, %v1875
  %1878 = vrot.lane.b32.xlu0 %v1598, 112
  %v1879 = vpop.permute.xlu0 %1878
  %v1881 = vsel %vm1625, %v1879, %v1751
  %v1882 = vsel %vm1627, %v1881, %v1598
  %v1883 = vsel %vm1629, %v1882, %v1617
  %1885 = vrot.lane.b32.xlu0 %v1883, 64
  %v1886 = vpop.permute.xlu0 %1885
  %v1888 = vmul.f32 %v1612, %v1886
  %1890 = vrot.lane.b32.xlu0 %v1888, 64
  %v1891 = vpop.permute.xlu0 %1890
  %v1893 = vadd.f32 %v1877, %v1891
  %1894 = vrot.lane.b32.xlu0 %v15, 81
  %v1895 = vpop.permute.xlu0 %1894
  %1897 = vrot.lane.b32.xlu0 %v1598, 113
  %v1898 = vpop.permute.xlu0 %1897
  %v1900 = vsel %vm1640, %v1895, %v1898
  %1902 = vrot.lane.b32.xlu0 %v1900, 8
  %v1903 = vpop.permute.xlu0 %1902
  %1905 = vrot.lane.b32.xlu0 %v1900, 16
  %v1906 = vpop.permute.xlu0 %1905
  %1908 = vrot.lane.b32.xlu0 %v1900, 24
  %v1909 = vpop.permute.xlu0 %1908
  %v1911 = vsel %vm1625, %v1900, %v1903
  %v1912 = vsel %vm1627, %v1911, %v1906
  %v1913 = vsel %vm1629, %v1912, %v1909
  %1915 = vrot.lane.b32.xlu0 %v1913, 96
  %v1916 = vpop.permute.xlu0 %1915
  %v1918 = vmul.f32 %v1612, %v1916
  %1920 = vrot.lane.b32.xlu0 %v1918, 32
  %v1921 = vpop.permute.xlu0 %1920
  %v1923 = vadd.f32 %v1893, %v1921
  %1924 = vrot.lane.b32.xlu0 %v15, 82
  %v1925 = vpop.permute.xlu0 %1924
  %1927 = vrot.lane.b32.xlu0 %v1598, 114
  %v1928 = vpop.permute.xlu0 %1927
  %v1930 = vsel %vm1671, %v1925, %v1928
  %1932 = vrot.lane.b32.xlu0 %v1930, 8
  %v1933 = vpop.permute.xlu0 %1932
  %1935 = vrot.lane.b32.xlu0 %v1930, 16
  %v1936 = vpop.permute.xlu0 %1935
  %1938 = vrot.lane.b32.xlu0 %v1930, 24
  %v1939 = vpop.permute.xlu0 %1938
  %v1941 = vsel %vm1625, %v1930, %v1933
  %v1942 = vsel %vm1627, %v1941, %v1936
  %v1943 = vsel %vm1629, %v1942, %v1939
  %v1944 = vmul.f32 %v1613, %v1943
  %v1945 = vadd.f32 %v1923, %v1944
  %1946 = vrot.lane.b32.xlu0 %v15, 83
  %v1947 = vpop.permute.xlu0 %1946
  %1949 = vrot.lane.b32.xlu0 %v1598, 115
  %v1950 = vpop.permute.xlu0 %1949
  %v1952 = vsel %vm1702, %v1947, %v1950
  %1954 = vrot.lane.b32.xlu0 %v1952, 8
  %v1955 = vpop.permute.xlu0 %1954
  %1957 = vrot.lane.b32.xlu0 %v1952, 16
  %v1958 = vpop.permute.xlu0 %1957
  %1960 = vrot.lane.b32.xlu0 %v1952, 24
  %v1961 = vpop.permute.xlu0 %1960
  %v1963 = vsel %vm1625, %v1952, %v1955
  %v1964 = vsel %vm1627, %v1963, %v1958
  %v1965 = vsel %vm1629, %v1964, %v1961
  %1967 = vrot.lane.b32.xlu0 %v1965, 32
  %v1968 = vpop.permute.xlu0 %1967
  %v1970 = vmul.f32 %v1613, %v1968
  %1972 = vrot.lane.b32.xlu0 %v1970, 96
  %v1973 = vpop.permute.xlu0 %1972
  %v1975 = vadd.f32 %v1945, %v1973
  %1976 = vrot.lane.b32.xlu0 %v15, 84
  %v1977 = vpop.permute.xlu0 %1976
  %1979 = vrot.lane.b32.xlu0 %v1598, 116
  %v1980 = vpop.permute.xlu0 %1979
  %v1982 = vsel %vm1733, %v1977, %v1980
  %1984 = vrot.lane.b32.xlu0 %v1982, 8
  %v1985 = vpop.permute.xlu0 %1984
  %1987 = vrot.lane.b32.xlu0 %v1982, 16
  %v1988 = vpop.permute.xlu0 %1987
  %1990 = vrot.lane.b32.xlu0 %v1982, 24
  %v1991 = vpop.permute.xlu0 %1990
  %v1993 = vsel %vm1625, %v1982, %v1985
  %v1994 = vsel %vm1627, %v1993, %v1988
  %v1995 = vsel %vm1629, %v1994, %v1991
  %1997 = vrot.lane.b32.xlu0 %v1995, 64
  %v1998 = vpop.permute.xlu0 %1997
  %v2000 = vmul.f32 %v1613, %v1998
  %2002 = vrot.lane.b32.xlu0 %v2000, 64
  %v2003 = vpop.permute.xlu0 %2002
  %v2005 = vadd.f32 %v1975, %v2003
  %2006 = vrot.lane.b32.xlu0 %v1598, 104
  %v2007 = vpop.permute.xlu0 %2006
  %v2009 = vsel %vm1625, %v2007, %v1879
  %v2010 = vsel %vm1627, %v2009, %v1751
  %v2011 = vsel %vm1629, %v2010, %v1598
  %2013 = vrot.lane.b32.xlu0 %v2011, 96
  %v2014 = vpop.permute.xlu0 %2013
  %v2016 = vmul.f32 %v1613, %v2014
  %2018 = vrot.lane.b32.xlu0 %v2016, 32
  %v2019 = vpop.permute.xlu0 %2018
  %v2021 = vadd.f32 %v2005, %v2019
  %2022 = vrot.lane.b32.xlu0 %v15, 65
  %v2023 = vpop.permute.xlu0 %2022
  %2025 = vrot.lane.b32.xlu0 %v1598, 105
  %v2026 = vpop.permute.xlu0 %2025
  %v2028 = vsel %vm1640, %v2023, %v2026
  %2030 = vrot.lane.b32.xlu0 %v2028, 8
  %v2031 = vpop.permute.xlu0 %2030
  %2033 = vrot.lane.b32.xlu0 %v2028, 16
  %v2034 = vpop.permute.xlu0 %2033
  %2036 = vrot.lane.b32.xlu0 %v2028, 24
  %v2037 = vpop.permute.xlu0 %2036
  %v2039 = vsel %vm1625, %v2028, %v2031
  %v2040 = vsel %vm1627, %v2039, %v2034
  %v2041 = vsel %vm1629, %v2040, %v2037
  %v2042 = vmul.f32 %v1614, %v2041
  %v2043 = vadd.f32 %v2021, %v2042
  %2044 = vrot.lane.b32.xlu0 %v15, 66
  %v2045 = vpop.permute.xlu0 %2044
  %2047 = vrot.lane.b32.xlu0 %v1598, 106
  %v2048 = vpop.permute.xlu0 %2047
  %v2050 = vsel %vm1671, %v2045, %v2048
  %2052 = vrot.lane.b32.xlu0 %v2050, 8
  %v2053 = vpop.permute.xlu0 %2052
  %2055 = vrot.lane.b32.xlu0 %v2050, 16
  %v2056 = vpop.permute.xlu0 %2055
  %2058 = vrot.lane.b32.xlu0 %v2050, 24
  %v2059 = vpop.permute.xlu0 %2058
  %v2061 = vsel %vm1625, %v2050, %v2053
  %v2062 = vsel %vm1627, %v2061, %v2056
  %v2063 = vsel %vm1629, %v2062, %v2059
  %2065 = vrot.lane.b32.xlu0 %v2063, 32
  %v2066 = vpop.permute.xlu0 %2065
  %v2068 = vmul.f32 %v1614, %v2066
  %2070 = vrot.lane.b32.xlu0 %v2068, 96
  %v2071 = vpop.permute.xlu0 %2070
  %v2073 = vadd.f32 %v2043, %v2071
  %2074 = vrot.lane.b32.xlu0 %v15, 67
  %v2075 = vpop.permute.xlu0 %2074
  %2077 = vrot.lane.b32.xlu0 %v1598, 107
  %v2078 = vpop.permute.xlu0 %2077
  %v2080 = vsel %vm1702, %v2075, %v2078
  %2082 = vrot.lane.b32.xlu0 %v2080, 8
  %v2083 = vpop.permute.xlu0 %2082
  %2085 = vrot.lane.b32.xlu0 %v2080, 16
  %v2086 = vpop.permute.xlu0 %2085
  %2088 = vrot.lane.b32.xlu0 %v2080, 24
  %v2089 = vpop.permute.xlu0 %2088
  %v2091 = vsel %vm1625, %v2080, %v2083
  %v2092 = vsel %vm1627, %v2091, %v2086
  %v2093 = vsel %vm1629, %v2092, %v2089
  %2095 = vrot.lane.b32.xlu0 %v2093, 64
  %v2096 = vpop.permute.xlu0 %2095
  %v2098 = vmul.f32 %v1614, %v2096
  %2100 = vrot.lane.b32.xlu0 %v2098, 64
  %v2101 = vpop.permute.xlu0 %2100
  %v2103 = vadd.f32 %v2073, %v2101
  %2104 = vrot.lane.b32.xlu0 %v15, 68
  %v2105 = vpop.permute.xlu0 %2104
  %2107 = vrot.lane.b32.xlu0 %v1598, 108
  %v2108 = vpop.permute.xlu0 %2107
  %v2110 = vsel %vm1733, %v2105, %v2108
  %2112 = vrot.lane.b32.xlu0 %v2110, 8
  %v2113 = vpop.permute.xlu0 %2112
  %2115 = vrot.lane.b32.xlu0 %v2110, 16
  %v2116 = vpop.permute.xlu0 %2115
  %2118 = vrot.lane.b32.xlu0 %v2110, 24
  %v2119 = vpop.permute.xlu0 %2118
  %v2121 = vsel %vm1625, %v2110, %v2113
  %v2122 = vsel %vm1627, %v2121, %v2116
  %v2123 = vsel %vm1629, %v2122, %v2119
  %2125 = vrot.lane.b32.xlu0 %v2123, 96
  %v2126 = vpop.permute.xlu0 %2125
  %v2128 = vmul.f32 %v1614, %v2126
  %2130 = vrot.lane.b32.xlu0 %v2128, 32
  %v2131 = vpop.permute.xlu0 %2130
  %v2133 = vadd.f32 %v2103, %v2131
  %v2135 = vcombine.high %v2133, %v2133
  %v2136 = vlaneseq
  %v2137 = vshrl.u32 %v2136, 7
  %v2138 = vsub.s32 0, %v2137
  %v2139 = vrot.slane %v2133, %v2138
  %v2140 = vlaneseq
  %v2141 = vshrl.u32 %v2140, 7
  %v2142 = vsub.s32 0, %v2141
  %v2143 = vrot.slane %v2135, %v2142
  %vm2144 = vcmask 1041409
  %v2145 = vsel %vm2144, %v2143, %v2139
  %v2147 = vlaneseq
  %v2148 = vshrl.u32 %v2147, 7
  %v2149 = vsub.s32 1, %v2148
  %v2150 = vrot.slane %v2133, %v2149
  %v2151 = vlaneseq
  %v2152 = vshrl.u32 %v2151, 7
  %v2153 = vsub.s32 1, %v2152
  %v2154 = vrot.slane %v2135, %v2153
  %v2155 = vsel %vm2144, %v2154, %v2150
  %2156 = vrot.lane.b32.xlu0 %v2155, 32
  %v2157 = vpop.permute.xlu0 %2156
  %v2159 = vlaneseq
  %v2160 = vshrl.u32 %v2159, 7
  %v2161 = vsub.s32 2, %v2160
  %v2162 = vrot.slane %v2133, %v2161
  %v2163 = vlaneseq
  %v2164 = vshrl.u32 %v2163, 7
  %v2165 = vsub.s32 2, %v2164
  %v2166 = vrot.slane %v2135, %v2165
  %v2167 = vsel %vm2144, %v2166, %v2162
  %2168 = vrot.lane.b32.xlu0 %v2167, 64
  %v2169 = vpop.permute.xlu0 %2168
  %v2171 = vlaneseq
  %v2172 = vshrl.u32 %v2171, 7
  %v2173 = vsub.s32 3, %v2172
  %v2174 = vrot.slane %v2133, %v2173
  %v2175 = vlaneseq
  %v2176 = vshrl.u32 %v2175, 7
  %v2177 = vsub.s32 3, %v2176
  %v2178 = vrot.slane %v2135, %v2177
  %v2179 = vsel %vm2144, %v2178, %v2174
  %2180 = vrot.lane.b32.xlu0 %v2179, 96
  %v2181 = vpop.permute.xlu0 %2180
  %vm2183 = vcmask 261120
  %v2184 = vsel %vm2183, %v2145, %v2157
  %v2185 = vsel %vm55, %v2184, %v2169
  %vm2186 = vcmask 785408
  %v2187 = vsel %vm2186, %v2185, %v2181
  %2188 = vst [vmem:[%s3] sm:$0x3] %v2187
  // Predicated region
  $region14: #{lift_tsmixer_forward.1} parent=0 // pred_check
    _
  $region15: #{lift_tsmixer_forward.1} parent=0 // pred_check_branch
    %2190 = sbr.rel (0) target = $region17
  $region16: #{lift_tsmixer_forward.1} parent=0 // pred_region
    _
  $region17: #{lift_tsmixer_forward.1} parent=0 // pred_fallthru
    _
  // Predicated region
  $region18: #{lift_tsmixer_forward.1} parent=0 // pred_check
    _
  $region19: #{lift_tsmixer_forward.1} parent=0 // pred_check_branch
    %2192 = sbr.rel (0) target = $region21
  $region20: #{lift_tsmixer_forward.1} parent=0 // pred_region
    _
  $region21: #{lift_tsmixer_forward.1} parent=0 // pred_fallthru
    _

</llo_original>
